<compile_context>
chip_gen: v7x
topology: tpu7x:2x2x1
jax: 0.10.0
libtpu: 0.0.40
codegen_flags: <defaults>
</compile_context>

<pallas_src>
import jax
import jax.numpy as jnp
from jax import lax
from jax.experimental import pallas as pl
from jax.experimental.pallas import tpu as pltpu

EPS = 1e-5  # BatchNorm2d default


def conv_bn_forward(x, weight, gamma, beta):
    """x: (N, Cin, H, W) NCHW f32; weight: (Cout, Cin, 3, 3); gamma/beta: (Cout,)."""
    x = x.astype(jnp.float32)
    weight = weight.astype(jnp.float32)
    N, Cin, H, W = x.shape
    Cout, _, KH, KW = weight.shape
    Ho, Wo = H - KH + 1, W - KW + 1
    HW = H * W
    M_valid = N * Ho * Wo  # number of (n, ho, wo) positions BN reduces over

    # pad the flattened per-image spatial axis so every tap slice [s : s+HW]
    # stays in bounds (max shift = 2*W + 2) and the lane dim is a 128 multiple.
    shift_max = (KH - 1) * W + (KW - 1)
    HW_pad = ((HW + shift_max + 127) // 128) * 128

    # ---- glue (same bytes as x, no 9x expansion) ----------------------------
    x_flat = jnp.pad(x.reshape(N, Cin, HW), ((0, 0), (0, 0), (0, HW_pad - HW)))
    w_flat = weight.reshape(-1)                       # (Cout*Cin*KH*KW,), (co,ci,kh,kw) order
    gamma2 = gamma.astype(jnp.float32).reshape(Cout, 1)
    beta2 = beta.astype(jnp.float32).reshape(Cout, 1)

    # validity mask over the flattened spatial axis: positions with h < Ho and
    # w < Wo are real conv outputs; the rest are garbage produced by the
    # shifted-slice trick and are excluded from the BN statistics.
    pos = jnp.arange(HW, dtype=jnp.int32)
    valid = ((pos // W < Ho) & (pos % W < Wo)).astype(jnp.float32).reshape(1, HW)

    def kernel(w_ref, gamma_ref, beta_ref, mask_ref, x_ref, out_ref,
               sum_ref, sumsq_ref, scale_ref, shift_ref):
        p = pl.program_id(0)   # 0: stats pass, 1: normalize/apply pass
        n = pl.program_id(1)   # image index

        # ---- conv tile: 9 shifted lane slices x Cin scalar MACs (VPU) -------
        accs = [None] * Cout                     # each (1, HW)
        for kh in range(KH):
            for kw in range(KW):
                s = kh * W + kw                  # static lane shift for this tap
                for ci in range(Cin):
                    xs = x_ref[0, ci:ci + 1, s:s + HW]          # (1, HW)
                    for co in range(Cout):
                        coef = w_ref[((co * Cin + ci) * KH + kh) * KW + kw]
                        t = coef * xs
                        accs[co] = t if accs[co] is None else accs[co] + t
        y = jnp.concatenate(accs, axis=0)        # (Cout, HW) f32, lane-dense

        @pl.when(p == 0)
        def _stats_pass():
            @pl.when(n == 0)
            def _init():
                sum_ref[...] = jnp.zeros_like(sum_ref)
                sumsq_ref[...] = jnp.zeros_like(sumsq_ref)

            ym = y * mask_ref[...]               # zero out invalid positions
            sum_ref[...] += jnp.sum(ym, axis=1, keepdims=True)
            sumsq_ref[...] += jnp.sum(ym * ym, axis=1, keepdims=True)

            @pl.when(n == N - 1)
            def _finalize():
                inv_m = 1.0 / float(M_valid)
                mean = sum_ref[...] * inv_m
                var = jnp.maximum(sumsq_ref[...] * inv_m - mean * mean, 0.0)
                sc = gamma_ref[...] * lax.rsqrt(var + EPS)
                scale_ref[...] = sc
                shift_ref[...] = beta_ref[...] - mean * sc

        @pl.when(p == 1)
        def _apply_pass():
            out_ref[0] = y * scale_ref[...] + shift_ref[...]

    out_full = pl.pallas_call(
        kernel,
        out_shape=jax.ShapeDtypeStruct((N, Cout, HW), jnp.float32),
        grid=(2, N),
        in_specs=[
            pl.BlockSpec(memory_space=pltpu.MemorySpace.SMEM),        # conv weights (scalars)
            pl.BlockSpec((Cout, 1), lambda p, n: (0, 0)),             # gamma
            pl.BlockSpec((Cout, 1), lambda p, n: (0, 0)),             # beta
            pl.BlockSpec((1, HW), lambda p, n: (0, 0)),               # validity mask
            pl.BlockSpec((1, Cin, HW_pad), lambda p, n: (n, 0, 0)),   # padded input tile
        ],
        # pass 0 parks the (unwritten) output buffer on block 0; pass 1 writes
        # every block fully before it is flushed -> no garbage write-back.
        out_specs=pl.BlockSpec((1, Cout, HW), lambda p, n: (p * n, 0, 0)),
        scratch_shapes=[pltpu.VMEM((Cout, 1), jnp.float32)] * 4,      # sum, sumsq, scale, shift
        compiler_params=pltpu.CompilerParams(
            dimension_semantics=("arbitrary", "arbitrary"),
            vmem_limit_bytes=32 * 1024 * 1024,
        ),
    )(w_flat, gamma2, beta2, valid, x_flat)

    # lane-dense (N, Cout, H*W) -> NCHW by reshape; drop the invalid rows/cols.
    # TODO(synk): PyTorch BatchNorm2d training also updates running_mean /
    # running_var buffers; those side effects are not materialized here.
    return out_full.reshape(N, Cout, H, W)[:, :, :Ho, :Wo]


def reference_forward(x, weight, gamma, beta):
    """Plain-JAX reference (conv + training-mode batch norm) for checking."""
    y = lax.conv_general_dilated(
        x, weight, window_strides=(1, 1), padding="VALID",
        dimension_numbers=("NCHW", "OIHW", "NCHW"),
    )
    mean = jnp.mean(y, axis=(0, 2, 3), keepdims=True)
    var = jnp.mean((y - mean) ** 2, axis=(0, 2, 3), keepdims=True)
    y_hat = (y - mean) * lax.rsqrt(var + EPS)
    return y_hat * gamma.reshape(1, -1, 1, 1) + beta.reshape(1, -1, 1, 1)


if __name__ == "__main__":
    key = jax.random.PRNGKey(0)
    kx, kw, kg, kb = jax.random.split(key, 4)

    # channels (3) and kernel (3x3) are fixed by the module; small batch/spatial.
    N, Cin, H, W = 2, 3, 16, 16
    Cout = 3

    x = jax.random.normal(kx, (N, Cin, H, W), dtype=jnp.float32)
    weight = jax.random.normal(kw, (Cout, Cin, 3, 3), dtype=jnp.float32) * 0.1
    gamma = 1.0 + 0.1 * jax.random.normal(kg, (Cout,), dtype=jnp.float32)
    beta = 0.1 * jax.random.normal(kb, (Cout,), dtype=jnp.float32)

    out = conv_bn_forward(x, weight, gamma, beta)
    jax.block_until_ready(out)

    ref = reference_forward(x, weight, gamma, beta)
    assert out.shape == (N, Cout, H - 2, W - 2)
    assert jnp.allclose(out, ref, atol=1e-4, rtol=1e-4), float(jnp.max(jnp.abs(out - ref)))

    print("KERNEL_OK")
</pallas_src>

<mosaic_0001>
module attributes {stable_mosaic.version = 11 : i64} {
  func.func @kernel(%arg0: i32, %arg1: i32, %arg2: memref<81xf32, #tpu.memory_space<smem>>, %arg3: memref<3x1xf32, #tpu.memory_space<vmem>>, %arg4: memref<3x1xf32, #tpu.memory_space<vmem>>, %arg5: memref<1x256xf32, #tpu.memory_space<vmem>>, %arg6: memref<1x3x384xf32, #tpu.memory_space<vmem>>, %arg7: memref<1x3x256xf32, #tpu.memory_space<vmem>>, %arg8: memref<3x1xf32, #tpu.memory_space<vmem>>, %arg9: memref<3x1xf32, #tpu.memory_space<vmem>>, %arg10: memref<3x1xf32, #tpu.memory_space<vmem>>, %arg11: memref<3x1xf32, #tpu.memory_space<vmem>>) attributes {dimension_semantics = [#tpu.dimension_semantics<arbitrary>, #tpu.dimension_semantics<arbitrary>], iteration_bounds = array<i64: 2, 2>, scalar_prefetch = 0 : i64, scratch_operands = 4 : i64, tpu.core_type = #tpu.core_type<tc>, window_params = [{transform_indices = @transform_0, window_bounds = array<i64: 81>}, {pipeline_mode = #tpu.pipeline_mode<synchronous>, transform_indices = @transform_1, window_bounds = array<i64: 3, 1>}, {pipeline_mode = #tpu.pipeline_mode<synchronous>, transform_indices = @transform_2, window_bounds = array<i64: 3, 1>}, {pipeline_mode = #tpu.pipeline_mode<synchronous>, transform_indices = @transform_3, window_bounds = array<i64: 1, 256>}, {transform_indices = @transform_4, window_bounds = array<i64: 1, 3, 384>}, {transform_indices = @transform_5, window_bounds = array<i64: 1, 3, 256>}]} {
    %c0 = arith.constant 0 : index
    %c0_0 = arith.constant 0 : index
    %c0_1 = arith.constant 0 : index
    %0 = vector.load %arg6[%c0, %c0_0, %c0_1] : memref<1x3x384xf32, #tpu.memory_space<vmem>>, vector<1x1x256xf32>
    %1 = vector.shape_cast %0 : vector<1x1x256xf32> to vector<1x256xf32>
    %c0_2 = arith.constant 0 : index
    %2 = memref.load %arg2[%c0_2] : memref<81xf32, #tpu.memory_space<smem>>
    %3 = vector.broadcast %2 : f32 to vector<1x256xf32>
    %4 = arith.mulf %3, %1 : vector<1x256xf32>
    %c27 = arith.constant 27 : index
    %5 = memref.load %arg2[%c27] : memref<81xf32, #tpu.memory_space<smem>>
    %6 = vector.broadcast %5 : f32 to vector<1x256xf32>
    %7 = arith.mulf %6, %1 : vector<1x256xf32>
    %c54 = arith.constant 54 : index
    %8 = memref.load %arg2[%c54] : memref<81xf32, #tpu.memory_space<smem>>
    %9 = vector.broadcast %8 : f32 to vector<1x256xf32>
    %10 = arith.mulf %9, %1 : vector<1x256xf32>
    %c0_3 = arith.constant 0 : index
    %c1 = arith.constant 1 : index
    %c0_4 = arith.constant 0 : index
    %11 = vector.load %arg6[%c0_3, %c1, %c0_4] : memref<1x3x384xf32, #tpu.memory_space<vmem>>, vector<1x1x256xf32>
    %12 = vector.shape_cast %11 : vector<1x1x256xf32> to vector<1x256xf32>
    %c9 = arith.constant 9 : index
    %13 = memref.load %arg2[%c9] : memref<81xf32, #tpu.memory_space<smem>>
    %14 = vector.broadcast %13 : f32 to vector<1x256xf32>
    %15 = arith.mulf %14, %12 : vector<1x256xf32>
    %16 = arith.addf %4, %15 : vector<1x256xf32>
    %c36 = arith.constant 36 : index
    %17 = memref.load %arg2[%c36] : memref<81xf32, #tpu.memory_space<smem>>
    %18 = vector.broadcast %17 : f32 to vector<1x256xf32>
    %19 = arith.mulf %18, %12 : vector<1x256xf32>
    %20 = arith.addf %7, %19 : vector<1x256xf32>
    %c63 = arith.constant 63 : index
    %21 = memref.load %arg2[%c63] : memref<81xf32, #tpu.memory_space<smem>>
    %22 = vector.broadcast %21 : f32 to vector<1x256xf32>
    %23 = arith.mulf %22, %12 : vector<1x256xf32>
    %24 = arith.addf %10, %23 : vector<1x256xf32>
    %c0_5 = arith.constant 0 : index
    %c2 = arith.constant 2 : index
    %c0_6 = arith.constant 0 : index
    %25 = vector.load %arg6[%c0_5, %c2, %c0_6] : memref<1x3x384xf32, #tpu.memory_space<vmem>>, vector<1x1x256xf32>
    %26 = vector.shape_cast %25 : vector<1x1x256xf32> to vector<1x256xf32>
    %c18 = arith.constant 18 : index
    %27 = memref.load %arg2[%c18] : memref<81xf32, #tpu.memory_space<smem>>
    %28 = vector.broadcast %27 : f32 to vector<1x256xf32>
    %29 = arith.mulf %28, %26 : vector<1x256xf32>
    %30 = arith.addf %16, %29 : vector<1x256xf32>
    %c45 = arith.constant 45 : index
    %31 = memref.load %arg2[%c45] : memref<81xf32, #tpu.memory_space<smem>>
    %32 = vector.broadcast %31 : f32 to vector<1x256xf32>
    %33 = arith.mulf %32, %26 : vector<1x256xf32>
    %34 = arith.addf %20, %33 : vector<1x256xf32>
    %c72 = arith.constant 72 : index
    %35 = memref.load %arg2[%c72] : memref<81xf32, #tpu.memory_space<smem>>
    %36 = vector.broadcast %35 : f32 to vector<1x256xf32>
    %37 = arith.mulf %36, %26 : vector<1x256xf32>
    %38 = arith.addf %24, %37 : vector<1x256xf32>
    %c0_7 = arith.constant 0 : index
    %c0_8 = arith.constant 0 : index
    %c1_9 = arith.constant 1 : index
    %39 = vector.load %arg6[%c0_7, %c0_8, %c1_9] : memref<1x3x384xf32, #tpu.memory_space<vmem>>, vector<1x1x256xf32>
    %40 = vector.shape_cast %39 : vector<1x1x256xf32> to vector<1x256xf32>
    %c1_10 = arith.constant 1 : index
    %41 = memref.load %arg2[%c1_10] : memref<81xf32, #tpu.memory_space<smem>>
    %42 = vector.broadcast %41 : f32 to vector<1x256xf32>
    %43 = arith.mulf %42, %40 : vector<1x256xf32>
    %44 = arith.addf %30, %43 : vector<1x256xf32>
    %c28 = arith.constant 28 : index
    %45 = memref.load %arg2[%c28] : memref<81xf32, #tpu.memory_space<smem>>
    %46 = vector.broadcast %45 : f32 to vector<1x256xf32>
    %47 = arith.mulf %46, %40 : vector<1x256xf32>
    %48 = arith.addf %34, %47 : vector<1x256xf32>
    %c55 = arith.constant 55 : index
    %49 = memref.load %arg2[%c55] : memref<81xf32, #tpu.memory_space<smem>>
    %50 = vector.broadcast %49 : f32 to vector<1x256xf32>
    %51 = arith.mulf %50, %40 : vector<1x256xf32>
    %52 = arith.addf %38, %51 : vector<1x256xf32>
    %c0_11 = arith.constant 0 : index
    %c1_12 = arith.constant 1 : index
    %c1_13 = arith.constant 1 : index
    %53 = vector.load %arg6[%c0_11, %c1_12, %c1_13] : memref<1x3x384xf32, #tpu.memory_space<vmem>>, vector<1x1x256xf32>
    %54 = vector.shape_cast %53 : vector<1x1x256xf32> to vector<1x256xf32>
    %c10 = arith.constant 10 : index
    %55 = memref.load %arg2[%c10] : memref<81xf32, #tpu.memory_space<smem>>
    %56 = vector.broadcast %55 : f32 to vector<1x256xf32>
    %57 = arith.mulf %56, %54 : vector<1x256xf32>
    %58 = arith.addf %44, %57 : vector<1x256xf32>
    %c37 = arith.constant 37 : index
    %59 = memref.load %arg2[%c37] : memref<81xf32, #tpu.memory_space<smem>>
    %60 = vector.broadcast %59 : f32 to vector<1x256xf32>
    %61 = arith.mulf %60, %54 : vector<1x256xf32>
    %62 = arith.addf %48, %61 : vector<1x256xf32>
    %c64 = arith.constant 64 : index
    %63 = memref.load %arg2[%c64] : memref<81xf32, #tpu.memory_space<smem>>
    %64 = vector.broadcast %63 : f32 to vector<1x256xf32>
    %65 = arith.mulf %64, %54 : vector<1x256xf32>
    %66 = arith.addf %52, %65 : vector<1x256xf32>
    %c0_14 = arith.constant 0 : index
    %c2_15 = arith.constant 2 : index
    %c1_16 = arith.constant 1 : index
    %67 = vector.load %arg6[%c0_14, %c2_15, %c1_16] : memref<1x3x384xf32, #tpu.memory_space<vmem>>, vector<1x1x256xf32>
    %68 = vector.shape_cast %67 : vector<1x1x256xf32> to vector<1x256xf32>
    %c19 = arith.constant 19 : index
    %69 = memref.load %arg2[%c19] : memref<81xf32, #tpu.memory_space<smem>>
    %70 = vector.broadcast %69 : f32 to vector<1x256xf32>
    %71 = arith.mulf %70, %68 : vector<1x256xf32>
    %72 = arith.addf %58, %71 : vector<1x256xf32>
    %c46 = arith.constant 46 : index
    %73 = memref.load %arg2[%c46] : memref<81xf32, #tpu.memory_space<smem>>
    %74 = vector.broadcast %73 : f32 to vector<1x256xf32>
    %75 = arith.mulf %74, %68 : vector<1x256xf32>
    %76 = arith.addf %62, %75 : vector<1x256xf32>
    %c73 = arith.constant 73 : index
    %77 = memref.load %arg2[%c73] : memref<81xf32, #tpu.memory_space<smem>>
    %78 = vector.broadcast %77 : f32 to vector<1x256xf32>
    %79 = arith.mulf %78, %68 : vector<1x256xf32>
    %80 = arith.addf %66, %79 : vector<1x256xf32>
    %c0_17 = arith.constant 0 : index
    %c0_18 = arith.constant 0 : index
    %c2_19 = arith.constant 2 : index
    %81 = vector.load %arg6[%c0_17, %c0_18, %c2_19] : memref<1x3x384xf32, #tpu.memory_space<vmem>>, vector<1x1x256xf32>
    %82 = vector.shape_cast %81 : vector<1x1x256xf32> to vector<1x256xf32>
    %c2_20 = arith.constant 2 : index
    %83 = memref.load %arg2[%c2_20] : memref<81xf32, #tpu.memory_space<smem>>
    %84 = vector.broadcast %83 : f32 to vector<1x256xf32>
    %85 = arith.mulf %84, %82 : vector<1x256xf32>
    %86 = arith.addf %72, %85 : vector<1x256xf32>
    %c29 = arith.constant 29 : index
    %87 = memref.load %arg2[%c29] : memref<81xf32, #tpu.memory_space<smem>>
    %88 = vector.broadcast %87 : f32 to vector<1x256xf32>
    %89 = arith.mulf %88, %82 : vector<1x256xf32>
    %90 = arith.addf %76, %89 : vector<1x256xf32>
    %c56 = arith.constant 56 : index
    %91 = memref.load %arg2[%c56] : memref<81xf32, #tpu.memory_space<smem>>
    %92 = vector.broadcast %91 : f32 to vector<1x256xf32>
    %93 = arith.mulf %92, %82 : vector<1x256xf32>
    %94 = arith.addf %80, %93 : vector<1x256xf32>
    %c0_21 = arith.constant 0 : index
    %c1_22 = arith.constant 1 : index
    %c2_23 = arith.constant 2 : index
    %95 = vector.load %arg6[%c0_21, %c1_22, %c2_23] : memref<1x3x384xf32, #tpu.memory_space<vmem>>, vector<1x1x256xf32>
    %96 = vector.shape_cast %95 : vector<1x1x256xf32> to vector<1x256xf32>
    %c11 = arith.constant 11 : index
    %97 = memref.load %arg2[%c11] : memref<81xf32, #tpu.memory_space<smem>>
    %98 = vector.broadcast %97 : f32 to vector<1x256xf32>
    %99 = arith.mulf %98, %96 : vector<1x256xf32>
    %100 = arith.addf %86, %99 : vector<1x256xf32>
    %c38 = arith.constant 38 : index
    %101 = memref.load %arg2[%c38] : memref<81xf32, #tpu.memory_space<smem>>
    %102 = vector.broadcast %101 : f32 to vector<1x256xf32>
    %103 = arith.mulf %102, %96 : vector<1x256xf32>
    %104 = arith.addf %90, %103 : vector<1x256xf32>
    %c65 = arith.constant 65 : index
    %105 = memref.load %arg2[%c65] : memref<81xf32, #tpu.memory_space<smem>>
    %106 = vector.broadcast %105 : f32 to vector<1x256xf32>
    %107 = arith.mulf %106, %96 : vector<1x256xf32>
    %108 = arith.addf %94, %107 : vector<1x256xf32>
    %c0_24 = arith.constant 0 : index
    %c2_25 = arith.constant 2 : index
    %c2_26 = arith.constant 2 : index
    %109 = vector.load %arg6[%c0_24, %c2_25, %c2_26] : memref<1x3x384xf32, #tpu.memory_space<vmem>>, vector<1x1x256xf32>
    %110 = vector.shape_cast %109 : vector<1x1x256xf32> to vector<1x256xf32>
    %c20 = arith.constant 20 : index
    %111 = memref.load %arg2[%c20] : memref<81xf32, #tpu.memory_space<smem>>
    %112 = vector.broadcast %111 : f32 to vector<1x256xf32>
    %113 = arith.mulf %112, %110 : vector<1x256xf32>
    %114 = arith.addf %100, %113 : vector<1x256xf32>
    %c47 = arith.constant 47 : index
    %115 = memref.load %arg2[%c47] : memref<81xf32, #tpu.memory_space<smem>>
    %116 = vector.broadcast %115 : f32 to vector<1x256xf32>
    %117 = arith.mulf %116, %110 : vector<1x256xf32>
    %118 = arith.addf %104, %117 : vector<1x256xf32>
    %c74 = arith.constant 74 : index
    %119 = memref.load %arg2[%c74] : memref<81xf32, #tpu.memory_space<smem>>
    %120 = vector.broadcast %119 : f32 to vector<1x256xf32>
    %121 = arith.mulf %120, %110 : vector<1x256xf32>
    %122 = arith.addf %108, %121 : vector<1x256xf32>
    %c0_27 = arith.constant 0 : index
    %c0_28 = arith.constant 0 : index
    %c16 = arith.constant 16 : index
    %123 = vector.load %arg6[%c0_27, %c0_28, %c16] : memref<1x3x384xf32, #tpu.memory_space<vmem>>, vector<1x1x256xf32>
    %124 = vector.shape_cast %123 : vector<1x1x256xf32> to vector<1x256xf32>
    %c3 = arith.constant 3 : index
    %125 = memref.load %arg2[%c3] : memref<81xf32, #tpu.memory_space<smem>>
    %126 = vector.broadcast %125 : f32 to vector<1x256xf32>
    %127 = arith.mulf %126, %124 : vector<1x256xf32>
    %128 = arith.addf %114, %127 : vector<1x256xf32>
    %c30 = arith.constant 30 : index
    %129 = memref.load %arg2[%c30] : memref<81xf32, #tpu.memory_space<smem>>
    %130 = vector.broadcast %129 : f32 to vector<1x256xf32>
    %131 = arith.mulf %130, %124 : vector<1x256xf32>
    %132 = arith.addf %118, %131 : vector<1x256xf32>
    %c57 = arith.constant 57 : index
    %133 = memref.load %arg2[%c57] : memref<81xf32, #tpu.memory_space<smem>>
    %134 = vector.broadcast %133 : f32 to vector<1x256xf32>
    %135 = arith.mulf %134, %124 : vector<1x256xf32>
    %136 = arith.addf %122, %135 : vector<1x256xf32>
    %c0_29 = arith.constant 0 : index
    %c1_30 = arith.constant 1 : index
    %c16_31 = arith.constant 16 : index
    %137 = vector.load %arg6[%c0_29, %c1_30, %c16_31] : memref<1x3x384xf32, #tpu.memory_space<vmem>>, vector<1x1x256xf32>
    %138 = vector.shape_cast %137 : vector<1x1x256xf32> to vector<1x256xf32>
    %c12 = arith.constant 12 : index
    %139 = memref.load %arg2[%c12] : memref<81xf32, #tpu.memory_space<smem>>
    %140 = vector.broadcast %139 : f32 to vector<1x256xf32>
    %141 = arith.mulf %140, %138 : vector<1x256xf32>
    %142 = arith.addf %128, %141 : vector<1x256xf32>
    %c39 = arith.constant 39 : index
    %143 = memref.load %arg2[%c39] : memref<81xf32, #tpu.memory_space<smem>>
    %144 = vector.broadcast %143 : f32 to vector<1x256xf32>
    %145 = arith.mulf %144, %138 : vector<1x256xf32>
    %146 = arith.addf %132, %145 : vector<1x256xf32>
    %c66 = arith.constant 66 : index
    %147 = memref.load %arg2[%c66] : memref<81xf32, #tpu.memory_space<smem>>
    %148 = vector.broadcast %147 : f32 to vector<1x256xf32>
    %149 = arith.mulf %148, %138 : vector<1x256xf32>
    %150 = arith.addf %136, %149 : vector<1x256xf32>
    %c0_32 = arith.constant 0 : index
    %c2_33 = arith.constant 2 : index
    %c16_34 = arith.constant 16 : index
    %151 = vector.load %arg6[%c0_32, %c2_33, %c16_34] : memref<1x3x384xf32, #tpu.memory_space<vmem>>, vector<1x1x256xf32>
    %152 = vector.shape_cast %151 : vector<1x1x256xf32> to vector<1x256xf32>
    %c21 = arith.constant 21 : index
    %153 = memref.load %arg2[%c21] : memref<81xf32, #tpu.memory_space<smem>>
    %154 = vector.broadcast %153 : f32 to vector<1x256xf32>
    %155 = arith.mulf %154, %152 : vector<1x256xf32>
    %156 = arith.addf %142, %155 : vector<1x256xf32>
    %c48 = arith.constant 48 : index
    %157 = memref.load %arg2[%c48] : memref<81xf32, #tpu.memory_space<smem>>
    %158 = vector.broadcast %157 : f32 to vector<1x256xf32>
    %159 = arith.mulf %158, %152 : vector<1x256xf32>
    %160 = arith.addf %146, %159 : vector<1x256xf32>
    %c75 = arith.constant 75 : index
    %161 = memref.load %arg2[%c75] : memref<81xf32, #tpu.memory_space<smem>>
    %162 = vector.broadcast %161 : f32 to vector<1x256xf32>
    %163 = arith.mulf %162, %152 : vector<1x256xf32>
    %164 = arith.addf %150, %163 : vector<1x256xf32>
    %c0_35 = arith.constant 0 : index
    %c0_36 = arith.constant 0 : index
    %c17 = arith.constant 17 : index
    %165 = vector.load %arg6[%c0_35, %c0_36, %c17] : memref<1x3x384xf32, #tpu.memory_space<vmem>>, vector<1x1x256xf32>
    %166 = vector.shape_cast %165 : vector<1x1x256xf32> to vector<1x256xf32>
    %c4 = arith.constant 4 : index
    %167 = memref.load %arg2[%c4] : memref<81xf32, #tpu.memory_space<smem>>
    %168 = vector.broadcast %167 : f32 to vector<1x256xf32>
    %169 = arith.mulf %168, %166 : vector<1x256xf32>
    %170 = arith.addf %156, %169 : vector<1x256xf32>
    %c31 = arith.constant 31 : index
    %171 = memref.load %arg2[%c31] : memref<81xf32, #tpu.memory_space<smem>>
    %172 = vector.broadcast %171 : f32 to vector<1x256xf32>
    %173 = arith.mulf %172, %166 : vector<1x256xf32>
    %174 = arith.addf %160, %173 : vector<1x256xf32>
    %c58 = arith.constant 58 : index
    %175 = memref.load %arg2[%c58] : memref<81xf32, #tpu.memory_space<smem>>
    %176 = vector.broadcast %175 : f32 to vector<1x256xf32>
    %177 = arith.mulf %176, %166 : vector<1x256xf32>
    %178 = arith.addf %164, %177 : vector<1x256xf32>
    %c0_37 = arith.constant 0 : index
    %c1_38 = arith.constant 1 : index
    %c17_39 = arith.constant 17 : index
    %179 = vector.load %arg6[%c0_37, %c1_38, %c17_39] : memref<1x3x384xf32, #tpu.memory_space<vmem>>, vector<1x1x256xf32>
    %180 = vector.shape_cast %179 : vector<1x1x256xf32> to vector<1x256xf32>
    %c13 = arith.constant 13 : index
    %181 = memref.load %arg2[%c13] : memref<81xf32, #tpu.memory_space<smem>>
    %182 = vector.broadcast %181 : f32 to vector<1x256xf32>
    %183 = arith.mulf %182, %180 : vector<1x256xf32>
    %184 = arith.addf %170, %183 : vector<1x256xf32>
    %c40 = arith.constant 40 : index
    %185 = memref.load %arg2[%c40] : memref<81xf32, #tpu.memory_space<smem>>
    %186 = vector.broadcast %185 : f32 to vector<1x256xf32>
    %187 = arith.mulf %186, %180 : vector<1x256xf32>
    %188 = arith.addf %174, %187 : vector<1x256xf32>
    %c67 = arith.constant 67 : index
    %189 = memref.load %arg2[%c67] : memref<81xf32, #tpu.memory_space<smem>>
    %190 = vector.broadcast %189 : f32 to vector<1x256xf32>
    %191 = arith.mulf %190, %180 : vector<1x256xf32>
    %192 = arith.addf %178, %191 : vector<1x256xf32>
    %c0_40 = arith.constant 0 : index
    %c2_41 = arith.constant 2 : index
    %c17_42 = arith.constant 17 : index
    %193 = vector.load %arg6[%c0_40, %c2_41, %c17_42] : memref<1x3x384xf32, #tpu.memory_space<vmem>>, vector<1x1x256xf32>
    %194 = vector.shape_cast %193 : vector<1x1x256xf32> to vector<1x256xf32>
    %c22 = arith.constant 22 : index
    %195 = memref.load %arg2[%c22] : memref<81xf32, #tpu.memory_space<smem>>
    %196 = vector.broadcast %195 : f32 to vector<1x256xf32>
    %197 = arith.mulf %196, %194 : vector<1x256xf32>
    %198 = arith.addf %184, %197 : vector<1x256xf32>
    %c49 = arith.constant 49 : index
    %199 = memref.load %arg2[%c49] : memref<81xf32, #tpu.memory_space<smem>>
    %200 = vector.broadcast %199 : f32 to vector<1x256xf32>
    %201 = arith.mulf %200, %194 : vector<1x256xf32>
    %202 = arith.addf %188, %201 : vector<1x256xf32>
    %c76 = arith.constant 76 : index
    %203 = memref.load %arg2[%c76] : memref<81xf32, #tpu.memory_space<smem>>
    %204 = vector.broadcast %203 : f32 to vector<1x256xf32>
    %205 = arith.mulf %204, %194 : vector<1x256xf32>
    %206 = arith.addf %192, %205 : vector<1x256xf32>
    %c0_43 = arith.constant 0 : index
    %c0_44 = arith.constant 0 : index
    %c18_45 = arith.constant 18 : index
    %207 = vector.load %arg6[%c0_43, %c0_44, %c18_45] : memref<1x3x384xf32, #tpu.memory_space<vmem>>, vector<1x1x256xf32>
    %208 = vector.shape_cast %207 : vector<1x1x256xf32> to vector<1x256xf32>
    %c5 = arith.constant 5 : index
    %209 = memref.load %arg2[%c5] : memref<81xf32, #tpu.memory_space<smem>>
    %210 = vector.broadcast %209 : f32 to vector<1x256xf32>
    %211 = arith.mulf %210, %208 : vector<1x256xf32>
    %212 = arith.addf %198, %211 : vector<1x256xf32>
    %c32 = arith.constant 32 : index
    %213 = memref.load %arg2[%c32] : memref<81xf32, #tpu.memory_space<smem>>
    %214 = vector.broadcast %213 : f32 to vector<1x256xf32>
    %215 = arith.mulf %214, %208 : vector<1x256xf32>
    %216 = arith.addf %202, %215 : vector<1x256xf32>
    %c59 = arith.constant 59 : index
    %217 = memref.load %arg2[%c59] : memref<81xf32, #tpu.memory_space<smem>>
    %218 = vector.broadcast %217 : f32 to vector<1x256xf32>
    %219 = arith.mulf %218, %208 : vector<1x256xf32>
    %220 = arith.addf %206, %219 : vector<1x256xf32>
    %c0_46 = arith.constant 0 : index
    %c1_47 = arith.constant 1 : index
    %c18_48 = arith.constant 18 : index
    %221 = vector.load %arg6[%c0_46, %c1_47, %c18_48] : memref<1x3x384xf32, #tpu.memory_space<vmem>>, vector<1x1x256xf32>
    %222 = vector.shape_cast %221 : vector<1x1x256xf32> to vector<1x256xf32>
    %c14 = arith.constant 14 : index
    %223 = memref.load %arg2[%c14] : memref<81xf32, #tpu.memory_space<smem>>
    %224 = vector.broadcast %223 : f32 to vector<1x256xf32>
    %225 = arith.mulf %224, %222 : vector<1x256xf32>
    %226 = arith.addf %212, %225 : vector<1x256xf32>
    %c41 = arith.constant 41 : index
    %227 = memref.load %arg2[%c41] : memref<81xf32, #tpu.memory_space<smem>>
    %228 = vector.broadcast %227 : f32 to vector<1x256xf32>
    %229 = arith.mulf %228, %222 : vector<1x256xf32>
    %230 = arith.addf %216, %229 : vector<1x256xf32>
    %c68 = arith.constant 68 : index
    %231 = memref.load %arg2[%c68] : memref<81xf32, #tpu.memory_space<smem>>
    %232 = vector.broadcast %231 : f32 to vector<1x256xf32>
    %233 = arith.mulf %232, %222 : vector<1x256xf32>
    %234 = arith.addf %220, %233 : vector<1x256xf32>
    %c0_49 = arith.constant 0 : index
    %c2_50 = arith.constant 2 : index
    %c18_51 = arith.constant 18 : index
    %235 = vector.load %arg6[%c0_49, %c2_50, %c18_51] : memref<1x3x384xf32, #tpu.memory_space<vmem>>, vector<1x1x256xf32>
    %236 = vector.shape_cast %235 : vector<1x1x256xf32> to vector<1x256xf32>
    %c23 = arith.constant 23 : index
    %237 = memref.load %arg2[%c23] : memref<81xf32, #tpu.memory_space<smem>>
    %238 = vector.broadcast %237 : f32 to vector<1x256xf32>
    %239 = arith.mulf %238, %236 : vector<1x256xf32>
    %240 = arith.addf %226, %239 : vector<1x256xf32>
    %c50 = arith.constant 50 : index
    %241 = memref.load %arg2[%c50] : memref<81xf32, #tpu.memory_space<smem>>
    %242 = vector.broadcast %241 : f32 to vector<1x256xf32>
    %243 = arith.mulf %242, %236 : vector<1x256xf32>
    %244 = arith.addf %230, %243 : vector<1x256xf32>
    %c77 = arith.constant 77 : index
    %245 = memref.load %arg2[%c77] : memref<81xf32, #tpu.memory_space<smem>>
    %246 = vector.broadcast %245 : f32 to vector<1x256xf32>
    %247 = arith.mulf %246, %236 : vector<1x256xf32>
    %248 = arith.addf %234, %247 : vector<1x256xf32>
    %c0_52 = arith.constant 0 : index
    %c0_53 = arith.constant 0 : index
    %c32_54 = arith.constant 32 : index
    %249 = vector.load %arg6[%c0_52, %c0_53, %c32_54] : memref<1x3x384xf32, #tpu.memory_space<vmem>>, vector<1x1x256xf32>
    %250 = vector.shape_cast %249 : vector<1x1x256xf32> to vector<1x256xf32>
    %c6 = arith.constant 6 : index
    %251 = memref.load %arg2[%c6] : memref<81xf32, #tpu.memory_space<smem>>
    %252 = vector.broadcast %251 : f32 to vector<1x256xf32>
    %253 = arith.mulf %252, %250 : vector<1x256xf32>
    %254 = arith.addf %240, %253 : vector<1x256xf32>
    %c33 = arith.constant 33 : index
    %255 = memref.load %arg2[%c33] : memref<81xf32, #tpu.memory_space<smem>>
    %256 = vector.broadcast %255 : f32 to vector<1x256xf32>
    %257 = arith.mulf %256, %250 : vector<1x256xf32>
    %258 = arith.addf %244, %257 : vector<1x256xf32>
    %c60 = arith.constant 60 : index
    %259 = memref.load %arg2[%c60] : memref<81xf32, #tpu.memory_space<smem>>
    %260 = vector.broadcast %259 : f32 to vector<1x256xf32>
    %261 = arith.mulf %260, %250 : vector<1x256xf32>
    %262 = arith.addf %248, %261 : vector<1x256xf32>
    %c0_55 = arith.constant 0 : index
    %c1_56 = arith.constant 1 : index
    %c32_57 = arith.constant 32 : index
    %263 = vector.load %arg6[%c0_55, %c1_56, %c32_57] : memref<1x3x384xf32, #tpu.memory_space<vmem>>, vector<1x1x256xf32>
    %264 = vector.shape_cast %263 : vector<1x1x256xf32> to vector<1x256xf32>
    %c15 = arith.constant 15 : index
    %265 = memref.load %arg2[%c15] : memref<81xf32, #tpu.memory_space<smem>>
    %266 = vector.broadcast %265 : f32 to vector<1x256xf32>
    %267 = arith.mulf %266, %264 : vector<1x256xf32>
    %268 = arith.addf %254, %267 : vector<1x256xf32>
    %c42 = arith.constant 42 : index
    %269 = memref.load %arg2[%c42] : memref<81xf32, #tpu.memory_space<smem>>
    %270 = vector.broadcast %269 : f32 to vector<1x256xf32>
    %271 = arith.mulf %270, %264 : vector<1x256xf32>
    %272 = arith.addf %258, %271 : vector<1x256xf32>
    %c69 = arith.constant 69 : index
    %273 = memref.load %arg2[%c69] : memref<81xf32, #tpu.memory_space<smem>>
    %274 = vector.broadcast %273 : f32 to vector<1x256xf32>
    %275 = arith.mulf %274, %264 : vector<1x256xf32>
    %276 = arith.addf %262, %275 : vector<1x256xf32>
    %c0_58 = arith.constant 0 : index
    %c2_59 = arith.constant 2 : index
    %c32_60 = arith.constant 32 : index
    %277 = vector.load %arg6[%c0_58, %c2_59, %c32_60] : memref<1x3x384xf32, #tpu.memory_space<vmem>>, vector<1x1x256xf32>
    %278 = vector.shape_cast %277 : vector<1x1x256xf32> to vector<1x256xf32>
    %c24 = arith.constant 24 : index
    %279 = memref.load %arg2[%c24] : memref<81xf32, #tpu.memory_space<smem>>
    %280 = vector.broadcast %279 : f32 to vector<1x256xf32>
    %281 = arith.mulf %280, %278 : vector<1x256xf32>
    %282 = arith.addf %268, %281 : vector<1x256xf32>
    %c51 = arith.constant 51 : index
    %283 = memref.load %arg2[%c51] : memref<81xf32, #tpu.memory_space<smem>>
    %284 = vector.broadcast %283 : f32 to vector<1x256xf32>
    %285 = arith.mulf %284, %278 : vector<1x256xf32>
    %286 = arith.addf %272, %285 : vector<1x256xf32>
    %c78 = arith.constant 78 : index
    %287 = memref.load %arg2[%c78] : memref<81xf32, #tpu.memory_space<smem>>
    %288 = vector.broadcast %287 : f32 to vector<1x256xf32>
    %289 = arith.mulf %288, %278 : vector<1x256xf32>
    %290 = arith.addf %276, %289 : vector<1x256xf32>
    %c0_61 = arith.constant 0 : index
    %c0_62 = arith.constant 0 : index
    %c33_63 = arith.constant 33 : index
    %291 = vector.load %arg6[%c0_61, %c0_62, %c33_63] : memref<1x3x384xf32, #tpu.memory_space<vmem>>, vector<1x1x256xf32>
    %292 = vector.shape_cast %291 : vector<1x1x256xf32> to vector<1x256xf32>
    %c7 = arith.constant 7 : index
    %293 = memref.load %arg2[%c7] : memref<81xf32, #tpu.memory_space<smem>>
    %294 = vector.broadcast %293 : f32 to vector<1x256xf32>
    %295 = arith.mulf %294, %292 : vector<1x256xf32>
    %296 = arith.addf %282, %295 : vector<1x256xf32>
    %c34 = arith.constant 34 : index
    %297 = memref.load %arg2[%c34] : memref<81xf32, #tpu.memory_space<smem>>
    %298 = vector.broadcast %297 : f32 to vector<1x256xf32>
    %299 = arith.mulf %298, %292 : vector<1x256xf32>
    %300 = arith.addf %286, %299 : vector<1x256xf32>
    %c61 = arith.constant 61 : index
    %301 = memref.load %arg2[%c61] : memref<81xf32, #tpu.memory_space<smem>>
    %302 = vector.broadcast %301 : f32 to vector<1x256xf32>
    %303 = arith.mulf %302, %292 : vector<1x256xf32>
    %304 = arith.addf %290, %303 : vector<1x256xf32>
    %c0_64 = arith.constant 0 : index
    %c1_65 = arith.constant 1 : index
    %c33_66 = arith.constant 33 : index
    %305 = vector.load %arg6[%c0_64, %c1_65, %c33_66] : memref<1x3x384xf32, #tpu.memory_space<vmem>>, vector<1x1x256xf32>
    %306 = vector.shape_cast %305 : vector<1x1x256xf32> to vector<1x256xf32>
    %c16_67 = arith.constant 16 : index
    %307 = memref.load %arg2[%c16_67] : memref<81xf32, #tpu.memory_space<smem>>
    %308 = vector.broadcast %307 : f32 to vector<1x256xf32>
    %309 = arith.mulf %308, %306 : vector<1x256xf32>
    %310 = arith.addf %296, %309 : vector<1x256xf32>
    %c43 = arith.constant 43 : index
    %311 = memref.load %arg2[%c43] : memref<81xf32, #tpu.memory_space<smem>>
    %312 = vector.broadcast %311 : f32 to vector<1x256xf32>
    %313 = arith.mulf %312, %306 : vector<1x256xf32>
    %314 = arith.addf %300, %313 : vector<1x256xf32>
    %c70 = arith.constant 70 : index
    %315 = memref.load %arg2[%c70] : memref<81xf32, #tpu.memory_space<smem>>
    %316 = vector.broadcast %315 : f32 to vector<1x256xf32>
    %317 = arith.mulf %316, %306 : vector<1x256xf32>
    %318 = arith.addf %304, %317 : vector<1x256xf32>
    %c0_68 = arith.constant 0 : index
    %c2_69 = arith.constant 2 : index
    %c33_70 = arith.constant 33 : index
    %319 = vector.load %arg6[%c0_68, %c2_69, %c33_70] : memref<1x3x384xf32, #tpu.memory_space<vmem>>, vector<1x1x256xf32>
    %320 = vector.shape_cast %319 : vector<1x1x256xf32> to vector<1x256xf32>
    %c25 = arith.constant 25 : index
    %321 = memref.load %arg2[%c25] : memref<81xf32, #tpu.memory_space<smem>>
    %322 = vector.broadcast %321 : f32 to vector<1x256xf32>
    %323 = arith.mulf %322, %320 : vector<1x256xf32>
    %324 = arith.addf %310, %323 : vector<1x256xf32>
    %c52 = arith.constant 52 : index
    %325 = memref.load %arg2[%c52] : memref<81xf32, #tpu.memory_space<smem>>
    %326 = vector.broadcast %325 : f32 to vector<1x256xf32>
    %327 = arith.mulf %326, %320 : vector<1x256xf32>
    %328 = arith.addf %314, %327 : vector<1x256xf32>
    %c79 = arith.constant 79 : index
    %329 = memref.load %arg2[%c79] : memref<81xf32, #tpu.memory_space<smem>>
    %330 = vector.broadcast %329 : f32 to vector<1x256xf32>
    %331 = arith.mulf %330, %320 : vector<1x256xf32>
    %332 = arith.addf %318, %331 : vector<1x256xf32>
    %c0_71 = arith.constant 0 : index
    %c0_72 = arith.constant 0 : index
    %c34_73 = arith.constant 34 : index
    %333 = vector.load %arg6[%c0_71, %c0_72, %c34_73] : memref<1x3x384xf32, #tpu.memory_space<vmem>>, vector<1x1x256xf32>
    %334 = vector.shape_cast %333 : vector<1x1x256xf32> to vector<1x256xf32>
    %c8 = arith.constant 8 : index
    %335 = memref.load %arg2[%c8] : memref<81xf32, #tpu.memory_space<smem>>
    %336 = vector.broadcast %335 : f32 to vector<1x256xf32>
    %337 = arith.mulf %336, %334 : vector<1x256xf32>
    %338 = arith.addf %324, %337 : vector<1x256xf32>
    %c35 = arith.constant 35 : index
    %339 = memref.load %arg2[%c35] : memref<81xf32, #tpu.memory_space<smem>>
    %340 = vector.broadcast %339 : f32 to vector<1x256xf32>
    %341 = arith.mulf %340, %334 : vector<1x256xf32>
    %342 = arith.addf %328, %341 : vector<1x256xf32>
    %c62 = arith.constant 62 : index
    %343 = memref.load %arg2[%c62] : memref<81xf32, #tpu.memory_space<smem>>
    %344 = vector.broadcast %343 : f32 to vector<1x256xf32>
    %345 = arith.mulf %344, %334 : vector<1x256xf32>
    %346 = arith.addf %332, %345 : vector<1x256xf32>
    %c0_74 = arith.constant 0 : index
    %c1_75 = arith.constant 1 : index
    %c34_76 = arith.constant 34 : index
    %347 = vector.load %arg6[%c0_74, %c1_75, %c34_76] : memref<1x3x384xf32, #tpu.memory_space<vmem>>, vector<1x1x256xf32>
    %348 = vector.shape_cast %347 : vector<1x1x256xf32> to vector<1x256xf32>
    %c17_77 = arith.constant 17 : index
    %349 = memref.load %arg2[%c17_77] : memref<81xf32, #tpu.memory_space<smem>>
    %350 = vector.broadcast %349 : f32 to vector<1x256xf32>
    %351 = arith.mulf %350, %348 : vector<1x256xf32>
    %352 = arith.addf %338, %351 : vector<1x256xf32>
    %c44 = arith.constant 44 : index
    %353 = memref.load %arg2[%c44] : memref<81xf32, #tpu.memory_space<smem>>
    %354 = vector.broadcast %353 : f32 to vector<1x256xf32>
    %355 = arith.mulf %354, %348 : vector<1x256xf32>
    %356 = arith.addf %342, %355 : vector<1x256xf32>
    %c71 = arith.constant 71 : index
    %357 = memref.load %arg2[%c71] : memref<81xf32, #tpu.memory_space<smem>>
    %358 = vector.broadcast %357 : f32 to vector<1x256xf32>
    %359 = arith.mulf %358, %348 : vector<1x256xf32>
    %360 = arith.addf %346, %359 : vector<1x256xf32>
    %c0_78 = arith.constant 0 : index
    %c2_79 = arith.constant 2 : index
    %c34_80 = arith.constant 34 : index
    %361 = vector.load %arg6[%c0_78, %c2_79, %c34_80] : memref<1x3x384xf32, #tpu.memory_space<vmem>>, vector<1x1x256xf32>
    %362 = vector.shape_cast %361 : vector<1x1x256xf32> to vector<1x256xf32>
    %c26 = arith.constant 26 : index
    %363 = memref.load %arg2[%c26] : memref<81xf32, #tpu.memory_space<smem>>
    %364 = vector.broadcast %363 : f32 to vector<1x256xf32>
    %365 = arith.mulf %364, %362 : vector<1x256xf32>
    %366 = arith.addf %352, %365 : vector<1x256xf32>
    %c53 = arith.constant 53 : index
    %367 = memref.load %arg2[%c53] : memref<81xf32, #tpu.memory_space<smem>>
    %368 = vector.broadcast %367 : f32 to vector<1x256xf32>
    %369 = arith.mulf %368, %362 : vector<1x256xf32>
    %370 = arith.addf %356, %369 : vector<1x256xf32>
    %c80 = arith.constant 80 : index
    %371 = memref.load %arg2[%c80] : memref<81xf32, #tpu.memory_space<smem>>
    %372 = vector.broadcast %371 : f32 to vector<1x256xf32>
    %373 = arith.mulf %372, %362 : vector<1x256xf32>
    %374 = arith.addf %360, %373 : vector<1x256xf32>
    %375 = tpu.concatenate %366, %370, %374 in 0 : vector<1x256xf32>, vector<1x256xf32>, vector<1x256xf32> -> vector<3x256xf32>
    %c0_i32 = arith.constant 0 : i32
    %376 = arith.cmpi eq, %arg0, %c0_i32 : i32
    %377 = arith.extui %376 : i1 to i32
    %c0_i32_81 = arith.constant 0 : i32
    %378 = arith.cmpi ne, %377, %c0_i32_81 : i32
    scf.if %378 {
      %c0_i32_83 = arith.constant 0 : i32
      %382 = arith.cmpi eq, %arg1, %c0_i32_83 : i32
      %383 = arith.extui %382 : i1 to i32
      %c0_i32_84 = arith.constant 0 : i32
      %384 = arith.cmpi ne, %383, %c0_i32_84 : i32
      scf.if %384 {
        %cst_98 = arith.constant 0.000000e+00 : f32
        %402 = vector.broadcast %cst_98 : f32 to vector<3x1xf32>
        %c0_99 = arith.constant 0 : index
        %c0_100 = arith.constant 0 : index
        %403 = vector.load %arg8[%c0_99, %c0_100] : memref<3x1xf32, #tpu.memory_space<vmem>>, vector<3x1xf32>
        tpu.vector_store %arg8[%c0_99, %c0_100], %402 {strides = array<i32>} : memref<3x1xf32, #tpu.memory_space<vmem>>, vector<3x1xf32>,
        %cst_101 = arith.constant 0.000000e+00 : f32
        %404 = vector.broadcast %cst_101 : f32 to vector<3x1xf32>
        %c0_102 = arith.constant 0 : index
        %c0_103 = arith.constant 0 : index
        %405 = vector.load %arg9[%c0_102, %c0_103] : memref<3x1xf32, #tpu.memory_space<vmem>>, vector<3x1xf32>
        tpu.vector_store %arg9[%c0_102, %c0_103], %404 {strides = array<i32>} : memref<3x1xf32, #tpu.memory_space<vmem>>, vector<3x1xf32>,
      } else {
      }
      %c0_85 = arith.constant 0 : index
      %c0_86 = arith.constant 0 : index
      %385 = vector.load %arg5[%c0_85, %c0_86] : memref<1x256xf32, #tpu.memory_space<vmem>>, vector<1x256xf32>
      %386 = vector.broadcast %385 : vector<1x256xf32> to vector<3x256xf32>
      %387 = arith.mulf %375, %386 : vector<3x256xf32>
      %c0_87 = arith.constant 0 : index
      %c0_88 = arith.constant 0 : index
      %388 = vector.load %arg8[%c0_87, %c0_88] : memref<3x1xf32, #tpu.memory_space<vmem>>, vector<3x1xf32>
      %cst = arith.constant dense<0.000000e+00> : vector<3xf32>
      %389 = vector.multi_reduction <add>, %387, %cst [1] : vector<3x256xf32> to vector<3xf32>
      %390 = vector.shape_cast %389 : vector<3xf32> to vector<3x1xf32>
      %391 = arith.addf %388, %390 : vector<3x1xf32>
      %c0_89 = arith.constant 0 : index
      %c0_90 = arith.constant 0 : index
      %392 = vector.load %arg8[%c0_89, %c0_90] : memref<3x1xf32, #tpu.memory_space<vmem>>, vector<3x1xf32>
      tpu.vector_store %arg8[%c0_89, %c0_90], %391 {strides = array<i32>} : memref<3x1xf32, #tpu.memory_space<vmem>>, vector<3x1xf32>,
      %c0_91 = arith.constant 0 : index
      %c0_92 = arith.constant 0 : index
      %393 = vector.load %arg9[%c0_91, %c0_92] : memref<3x1xf32, #tpu.memory_space<vmem>>, vector<3x1xf32>
      %394 = arith.mulf %387, %387 : vector<3x256xf32>
      %cst_93 = arith.constant dense<0.000000e+00> : vector<3xf32>
      %395 = vector.multi_reduction <add>, %394, %cst_93 [1] : vector<3x256xf32> to vector<3xf32>
      %396 = vector.shape_cast %395 : vector<3xf32> to vector<3x1xf32>
      %397 = arith.addf %393, %396 : vector<3x1xf32>
      %c0_94 = arith.constant 0 : index
      %c0_95 = arith.constant 0 : index
      %398 = vector.load %arg9[%c0_94, %c0_95] : memref<3x1xf32, #tpu.memory_space<vmem>>, vector<3x1xf32>
      tpu.vector_store %arg9[%c0_94, %c0_95], %397 {strides = array<i32>} : memref<3x1xf32, #tpu.memory_space<vmem>>, vector<3x1xf32>,
      %c1_i32_96 = arith.constant 1 : i32
      %399 = arith.cmpi eq, %arg1, %c1_i32_96 : i32
      %400 = arith.extui %399 : i1 to i32
      %c0_i32_97 = arith.constant 0 : i32
      %401 = arith.cmpi ne, %400, %c0_i32_97 : i32
      scf.if %401 {
        %c0_98 = arith.constant 0 : index
        %c0_99 = arith.constant 0 : index
        %402 = vector.load %arg8[%c0_98, %c0_99] : memref<3x1xf32, #tpu.memory_space<vmem>>, vector<3x1xf32>
        %cst_100 = arith.constant 0.00255102036 : f32
        %403 = vector.broadcast %cst_100 : f32 to vector<3x1xf32>
        %404 = arith.mulf %402, %403 : vector<3x1xf32>
        %c0_101 = arith.constant 0 : index
        %c0_102 = arith.constant 0 : index
        %405 = vector.load %arg9[%c0_101, %c0_102] : memref<3x1xf32, #tpu.memory_space<vmem>>, vector<3x1xf32>
        %cst_103 = arith.constant 0.00255102036 : f32
        %406 = vector.broadcast %cst_103 : f32 to vector<3x1xf32>
        %407 = arith.mulf %405, %406 : vector<3x1xf32>
        %408 = arith.mulf %404, %404 : vector<3x1xf32>
        %409 = arith.subf %407, %408 : vector<3x1xf32>
        %cst_104 = arith.constant 0.000000e+00 : f32
        %410 = vector.broadcast %cst_104 : f32 to vector<3x1xf32>
        %411 = arith.maximumf %409, %410 : vector<3x1xf32>
        %c0_105 = arith.constant 0 : index
        %c0_106 = arith.constant 0 : index
        %412 = vector.load %arg3[%c0_105, %c0_106] : memref<3x1xf32, #tpu.memory_space<vmem>>, vector<3x1xf32>
        %cst_107 = arith.constant 9.99999974E-6 : f32
        %413 = vector.broadcast %cst_107 : f32 to vector<3x1xf32>
        %414 = arith.addf %411, %413 : vector<3x1xf32>
        %415 = math.rsqrt %414 : vector<3x1xf32>
        %416 = arith.mulf %412, %415 : vector<3x1xf32>
        %c0_108 = arith.constant 0 : index
        %c0_109 = arith.constant 0 : index
        %417 = vector.load %arg10[%c0_108, %c0_109] : memref<3x1xf32, #tpu.memory_space<vmem>>, vector<3x1xf32>
        tpu.vector_store %arg10[%c0_108, %c0_109], %416 {strides = array<i32>} : memref<3x1xf32, #tpu.memory_space<vmem>>, vector<3x1xf32>,
        %c0_110 = arith.constant 0 : index
        %c0_111 = arith.constant 0 : index
        %418 = vector.load %arg4[%c0_110, %c0_111] : memref<3x1xf32, #tpu.memory_space<vmem>>, vector<3x1xf32>
        %419 = arith.mulf %404, %416 : vector<3x1xf32>
        %420 = arith.subf %418, %419 : vector<3x1xf32>
        %c0_112 = arith.constant 0 : index
        %c0_113 = arith.constant 0 : index
        %421 = vector.load %arg11[%c0_112, %c0_113] : memref<3x1xf32, #tpu.memory_space<vmem>>, vector<3x1xf32>
        tpu.vector_store %arg11[%c0_112, %c0_113], %420 {strides = array<i32>} : memref<3x1xf32, #tpu.memory_space<vmem>>, vector<3x1xf32>,
      } else {
      }
    } else {
    }
    %c1_i32 = arith.constant 1 : i32
    %379 = arith.cmpi eq, %arg0, %c1_i32 : i32
    %380 = arith.extui %379 : i1 to i32
    %c0_i32_82 = arith.constant 0 : i32
    %381 = arith.cmpi ne, %380, %c0_i32_82 : i32
    scf.if %381 {
      %c0_83 = arith.constant 0 : index
      %c0_84 = arith.constant 0 : index
      %382 = vector.load %arg10[%c0_83, %c0_84] : memref<3x1xf32, #tpu.memory_space<vmem>>, vector<3x1xf32>
      %383 = vector.broadcast %382 : vector<3x1xf32> to vector<3x256xf32>
      %384 = arith.mulf %375, %383 : vector<3x256xf32>
      %c0_85 = arith.constant 0 : index
      %c0_86 = arith.constant 0 : index
      %385 = vector.load %arg11[%c0_85, %c0_86] : memref<3x1xf32, #tpu.memory_space<vmem>>, vector<3x1xf32>
      %386 = vector.broadcast %385 : vector<3x1xf32> to vector<3x256xf32>
      %387 = arith.addf %384, %386 : vector<3x256xf32>
      %c0_87 = arith.constant 0 : index
      %c0_88 = arith.constant 0 : index
      %c0_89 = arith.constant 0 : index
      %388 = vector.load %arg7[%c0_87, %c0_88, %c0_89] : memref<1x3x256xf32, #tpu.memory_space<vmem>>, vector<1x3x256xf32>
      %389 = vector.shape_cast %388 : vector<1x3x256xf32> to vector<3x256xf32>
      %390 = vector.shape_cast %387 : vector<3x256xf32> to vector<1x3x256xf32>
      tpu.vector_store %arg7[%c0_87, %c0_88, %c0_89], %390 {strides = array<i32>} : memref<1x3x256xf32, #tpu.memory_space<vmem>>, vector<1x3x256xf32>,
    } else {
    }
    return
  }
  func.func @transform_0(%arg0: i32, %arg1: i32) -> i32 {
    %c0_i32 = arith.constant 0 : i32
    %c0_i32_0 = arith.constant 0 : i32
    return %c0_i32 : i32
  }
  func.func @transform_1(%arg0: i32, %arg1: i32) -> (i32, i32) {
    %c0_i32 = arith.constant 0 : i32
    %c0_i32_0 = arith.constant 0 : i32
    %c0_i32_1 = arith.constant 0 : i32
    return %c0_i32, %c0_i32_0 : i32, i32
  }
  func.func @transform_2(%arg0: i32, %arg1: i32) -> (i32, i32) {
    %c0_i32 = arith.constant 0 : i32
    %c0_i32_0 = arith.constant 0 : i32
    %c0_i32_1 = arith.constant 0 : i32
    return %c0_i32, %c0_i32_0 : i32, i32
  }
  func.func @transform_3(%arg0: i32, %arg1: i32) -> (i32, i32) {
    %c0_i32 = arith.constant 0 : i32
    %c0_i32_0 = arith.constant 0 : i32
    %c0_i32_1 = arith.constant 0 : i32
    return %c0_i32, %c0_i32_0 : i32, i32
  }
  func.func @transform_4(%arg0: i32, %arg1: i32) -> (i32, i32, i32) {
    %c0_i32 = arith.constant 0 : i32
    %c0_i32_0 = arith.constant 0 : i32
    %c0_i32_1 = arith.constant 0 : i32
    return %arg1, %c0_i32, %c0_i32_0 : i32, i32, i32
  }
  func.func @transform_5(%arg0: i32, %arg1: i32) -> (i32, i32, i32) {
    %0 = arith.muli %arg0, %arg1 : i32
    %c0_i32 = arith.constant 0 : i32
    %c0_i32_0 = arith.constant 0 : i32
    %c0_i32_1 = arith.constant 0 : i32
    return %0, %c0_i32, %c0_i32_0 : i32, i32, i32
  }
}

</mosaic_0001>

<llo_original>
// kernel: tpu_custom_call.1
$region0: #{tpu_custom_call.1}
  #allocation0 [shape = 'u32[]', space=smem, size = 0x4, offset = 0x4, fixed_abs, tag = 'smem constant byte address 0x4 - core index']
  #allocation1 [shape = 'u32[144,128]{1,0:T(1,128)}', space=vmem, size = 0x12000, scoped, tag = 'internal scratch']
  #allocation2 [shape = 'f32[3,1]{1,0:T(4,128)}', space=vmem, size = 0x800, scoped, tag = 'scratch operand']
  #allocation3 [shape = 'f32[3,1]{1,0:T(4,128)}', space=vmem, size = 0x800, scoped, tag = 'scratch operand']
  #allocation4 [shape = 'f32[3,1]{1,0:T(4,128)}', space=vmem, size = 0x800, scoped, tag = 'scratch operand']
  #allocation5 [shape = 'f32[3,1]{1,0:T(4,128)}', space=vmem, size = 0x800, scoped, tag = 'scratch operand']
  %s0 = inlined_call_operand.vmem [shape: f32[81], index: 0, kind: input, shape index: {}]
  %s1 = inlined_call_operand.vmem [shape: f32[3,1], index: 1, kind: input, shape index: {}]
  %s2 = inlined_call_operand.vmem [shape: f32[3,1], index: 2, kind: input, shape index: {}]
  %s3 = inlined_call_operand.vmem [shape: f32[1,256], index: 3, kind: input, shape index: {}]
  %s4 = inlined_call_operand.vmem [shape: f32[2,3,384], index: 4, kind: input, shape index: {}]
  %s5 = inlined_call_operand.vmem [shape: f32[2,3,256], index: 5, kind: output, shape index: {}]
  %s6 = sld [smem:[#allocation0]]
  $region73: #{tpu_custom_call.1} parent=0
    _
  %s8 = ssub.s32 1, %s6
  %s9 = scalar_select 0, %s8, %s6
  $region1: #{tpu_custom_call.1} parent=0
    #allocation6 [shape = 'u8[512]{0}', space=smem, size = 0x200, scoped, tag = 'input window, operand 0, single buffered']
    #allocation7 [shape = 's32[2]{0}', space=sflag, size = 0x8, scoped, tag = 'scoped memory for tpu_custom_call.1']
    %10 = vsyncpa [#allocation7], 0
    loop: start=0, step=1, limit=6
    $region2: #{tpu_custom_call.1} parent=1 // loop_pre_header
      _
    $region3: #{tpu_custom_call.1} parent=1 // loop_header
      %s12 = sphi 0, %s16
      %p13 = scmp.ge.s32.totalorder %s12, 6
      %s19 = sphi 0, %s31
      %s20 = sphi 0, %s27
      %s21 = sphi 0, %s19
      %s22 = sphi 0, %s20
      %s23 = sphi 0, %s21
      %s24 = sphi 0, %s22
      %s32 = sphi 0, %s32
      %s34 = sphi 0, %s32
      %s35 = sphi 0, %s34
      %s49 = sphi 0, %s35
      %s53 = sphi 0, %s53
      %s55 = sphi 0, %s53
      %s56 = sphi 0, %s55
      %s70 = sphi 0, %s56
      %s74 = sphi 0, %s74
      %s76 = sphi 0, %s74
      %s77 = sphi 0, %s76
      %s91 = sphi 0, %s77
      %s95 = sphi 0, %s95
      %s97 = sphi 0, %s95
      %s98 = sphi 0, %s97
      %s112 = sphi 0, %s98
      %s118 = sphi 0, %s120
      %s121 = sphi 0, %s118
      %s122 = sphi 0, %s121
      %s138 = sphi 0, %s122
      %s146 = sphi 0, %s148
      %s149 = sphi 0, %s146
      %s150 = sphi 0, %s149
      %s166 = sphi 0, %s150
    $region4: #{tpu_custom_call.1} parent=1 // loop_header_branch
      %15 = sbr.rel (%p13) target = $region8
    $region5: #{tpu_custom_call.1} parent=1 // loop_body
      %s17 = ssub.s32 %s12, 1
      %s18 = ssub.s32 %s12, 2
      %s25 = sadd.s32 1, %s20
      %p26 = scmp.ge.s32.totalorder %s25, 2
      %s27 = scalar_select %p26, 0, %s25
      %s28 = sadd.s32 1, %s19
      %s29 = scalar_select %p26, %s28, %s19
      %p30 = scmp.ge.s32.totalorder %s29, 2
      %s31 = scalar_select %p30, 0, %s29
      %s33 = sadd.s32 %s32, 1
      %p36 = scmp.eq.s32.totalorder %s12, 3
      %p37 = scmp.ne.s32.totalorder %s32, %s34
      %p38 = scmp.eq.s32.totalorder %s12, 0
      %p39 = por %p37, %p38
      %p40 = scmp.ne.s32.totalorder %s32, %s34
      %p41 = scmp.eq.s32.totalorder %s17, 3
      %p42 = por %p40, %p41
      %p43 = scmp.ne.s32.totalorder %s34, %s35
      %p44 = scmp.eq.s32.totalorder %s17, 0
      %p45 = por %p43, %p44
      %p46 = scmp.ne.s32.totalorder %s34, %s35
      %p47 = scmp.eq.s32.totalorder %s18, 3
      %p48 = por %p46, %p47
      %p50 = scmp.ne.s32.totalorder %s35, %s49
      %p51 = scmp.eq.s32.totalorder %s18, 0
      %p52 = por %p50, %p51
      %s54 = sadd.s32 %s53, 1
      %p57 = scmp.eq.s32.totalorder %s12, 3
      %p58 = scmp.ne.s32.totalorder %s53, %s55
      %p59 = scmp.eq.s32.totalorder %s12, 0
      %p60 = por %p58, %p59
      %p61 = scmp.ne.s32.totalorder %s53, %s55
      %p62 = scmp.eq.s32.totalorder %s17, 3
      %p63 = por %p61, %p62
      %p64 = scmp.ne.s32.totalorder %s55, %s56
      %p65 = scmp.eq.s32.totalorder %s17, 0
      %p66 = por %p64, %p65
      %p67 = scmp.ne.s32.totalorder %s55, %s56
      %p68 = scmp.eq.s32.totalorder %s18, 3
      %p69 = por %p67, %p68
      %p71 = scmp.ne.s32.totalorder %s56, %s70
      %p72 = scmp.eq.s32.totalorder %s18, 0
      %p73 = por %p71, %p72
      %s75 = sadd.s32 %s74, 1
      %p78 = scmp.eq.s32.totalorder %s12, 3
      %p79 = scmp.ne.s32.totalorder %s74, %s76
      %p80 = scmp.eq.s32.totalorder %s12, 0
      %p81 = por %p79, %p80
      %p82 = scmp.ne.s32.totalorder %s74, %s76
      %p83 = scmp.eq.s32.totalorder %s17, 3
      %p84 = por %p82, %p83
      %p85 = scmp.ne.s32.totalorder %s76, %s77
      %p86 = scmp.eq.s32.totalorder %s17, 0
      %p87 = por %p85, %p86
      %p88 = scmp.ne.s32.totalorder %s76, %s77
      %p89 = scmp.eq.s32.totalorder %s18, 3
      %p90 = por %p88, %p89
      %p92 = scmp.ne.s32.totalorder %s77, %s91
      %p93 = scmp.eq.s32.totalorder %s18, 0
      %p94 = por %p92, %p93
      %s96 = sadd.s32 %s95, 1
      %p99 = scmp.eq.s32.totalorder %s12, 3
      %p100 = scmp.ne.s32.totalorder %s95, %s97
      %p101 = scmp.eq.s32.totalorder %s12, 0
      %p102 = por %p100, %p101
      %p103 = scmp.ne.s32.totalorder %s95, %s97
      %p104 = scmp.eq.s32.totalorder %s17, 3
      %p105 = por %p103, %p104
      %p106 = scmp.ne.s32.totalorder %s97, %s98
      %p107 = scmp.eq.s32.totalorder %s17, 0
      %p108 = por %p106, %p107
      %p109 = scmp.ne.s32.totalorder %s97, %s98
      %p110 = scmp.eq.s32.totalorder %s18, 3
      %p111 = por %p109, %p110
      %p113 = scmp.ne.s32.totalorder %s98, %s112
      %p114 = scmp.eq.s32.totalorder %s18, 0
      %p115 = por %p113, %p114
      %s116 = ssub.s32 %s20, %s27
      %p117 = scmp.eq.s32.totalorder %s116, 0
      %s119 = sadd.s32 %s118, 1
      %s120 = scalar_select %p117, %s118, %s119
      %p123 = pneg %p117
      %p124 = scmp.eq.s32.totalorder %s12, 3
      %p125 = por %p123, %p124
      %p126 = scmp.ne.s32.totalorder %s118, %s121
      %p127 = scmp.eq.s32.totalorder %s12, 0
      %p128 = por %p126, %p127
      %p129 = scmp.ne.s32.totalorder %s118, %s121
      %p130 = scmp.eq.s32.totalorder %s17, 3
      %p131 = por %p129, %p130
      %p132 = scmp.ne.s32.totalorder %s121, %s122
      %p133 = scmp.eq.s32.totalorder %s17, 0
      %p134 = por %p132, %p133
      %p135 = scmp.ne.s32.totalorder %s121, %s122
      %p136 = scmp.eq.s32.totalorder %s18, 3
      %p137 = por %p135, %p136
      %p139 = scmp.ne.s32.totalorder %s122, %s138
      %p140 = scmp.eq.s32.totalorder %s18, 0
      %p141 = por %p139, %p140
      %s142 = smul.u32 %s19, %s20
      %s143 = smul.u32 %s31, %s27
      %s144 = ssub.s32 %s142, %s143
      %p145 = scmp.eq.s32.totalorder %s144, 0
      %s147 = sadd.s32 %s146, 1
      %s148 = scalar_select %p145, %s146, %s147
      %p151 = pneg %p145
      %p152 = scmp.eq.s32.totalorder %s12, 3
      %p153 = por %p151, %p152
      %p154 = scmp.ne.s32.totalorder %s146, %s149
      %p155 = scmp.eq.s32.totalorder %s12, 0
      %p156 = por %p154, %p155
      %p157 = scmp.ne.s32.totalorder %s146, %s149
      %p158 = scmp.eq.s32.totalorder %s17, 3
      %p159 = por %p157, %p158
      %p160 = scmp.ne.s32.totalorder %s149, %s150
      %p161 = scmp.eq.s32.totalorder %s17, 0
      %p162 = por %p160, %p161
      %p163 = scmp.ne.s32.totalorder %s149, %s150
      %p164 = scmp.eq.s32.totalorder %s18, 3
      %p165 = por %p163, %p164
      %p167 = scmp.ne.s32.totalorder %s150, %s166
      %p168 = scmp.eq.s32.totalorder %s18, 0
      %p169 = por %p167, %p168
      %p170 = scmp.le.s32.totalorder 1, %s12
      %p171 = scmp.lt.s32.totalorder %s12, 5
      %p172 = pnand %p170, %p171
      %p173 = pneg %p172
      // Predicated region
      $region9: #{tpu_custom_call.1} parent=5 // pred_check
        _
      $region10: #{tpu_custom_call.1} parent=5 // pred_check_branch
        %175 = sbr.rel (%p172) target = $region12
      $region11: #{tpu_custom_call.1} parent=5 // pred_region
        %s176 = ssub.s32 %s12, 1
        // Predicated region
        $region13: #{tpu_custom_call.1} parent=11 // pred_check
          %p177 = pneg %p45
        $region14: #{tpu_custom_call.1} parent=11 // pred_check_branch
          %179 = sbr.rel (%p177) target = $region16
        $region15: #{tpu_custom_call.1} parent=11 // pred_region
          %s181 = ssub.s32 16, 16
          %182 = vsyncadd [#allocation7], %s181
          %s184 = sshll.u32 %s0, 4
          %s185 = int_to_ptr.vmem [resolvable:$true] %s184
          %187 = dma.vmem_to_smem %s185, 16, [#allocation6], [#allocation7]
        $region16: #{tpu_custom_call.1} parent=11 // pred_fallthru
          _
        // Predicated region
        $region17: #{tpu_custom_call.1} parent=11 // pred_check
          %p188 = pneg %p66
        $region18: #{tpu_custom_call.1} parent=11 // pred_check_branch
          %190 = sbr.rel (%p188) target = $region20
        $region19: #{tpu_custom_call.1} parent=11 // pred_region
          _
        $region20: #{tpu_custom_call.1} parent=11 // pred_fallthru
          _
        // Predicated region
        $region21: #{tpu_custom_call.1} parent=11 // pred_check
          %p191 = pneg %p87
        $region22: #{tpu_custom_call.1} parent=11 // pred_check_branch
          %193 = sbr.rel (%p191) target = $region24
        $region23: #{tpu_custom_call.1} parent=11 // pred_region
          _
        $region24: #{tpu_custom_call.1} parent=11 // pred_fallthru
          _
        // Predicated region
        $region25: #{tpu_custom_call.1} parent=11 // pred_check
          %p194 = pneg %p108
        $region26: #{tpu_custom_call.1} parent=11 // pred_check_branch
          %196 = sbr.rel (%p194) target = $region28
        $region27: #{tpu_custom_call.1} parent=11 // pred_region
          _
        $region28: #{tpu_custom_call.1} parent=11 // pred_fallthru
          _
      $region12: #{tpu_custom_call.1} parent=5 // pred_fallthru
        _
      %p197 = scmp.lt.s32.totalorder %s12, 4
      // Predicated region
      $region29: #{tpu_custom_call.1} parent=5 // pred_check
        %p198 = pneg %p197
      $region30: #{tpu_custom_call.1} parent=5 // pred_check_branch
        %200 = sbr.rel (%p198) target = $region32
      $region31: #{tpu_custom_call.1} parent=5 // pred_region
        // Predicated region
        $region33: #{tpu_custom_call.1} parent=31 // pred_check
          %p201 = pneg %p128
        $region34: #{tpu_custom_call.1} parent=31 // pred_check_branch
          %203 = sbr.rel (%p201) target = $region36
        $region35: #{tpu_custom_call.1} parent=31 // pred_region
          %p204 = scmp.lt.s32.totalorder %s20, 1
          %s205 = scalar_select %p204, %s20, 1
          %s206 = smul.addr %s205, 3
          %s207 = smul.addr %s206, 4
          %s208 = scalar_lea.vmem %s4, %s207
        $region36: #{tpu_custom_call.1} parent=31 // pred_fallthru
          _
      $region32: #{tpu_custom_call.1} parent=5 // pred_fallthru
        _
      %p209 = scmp.le.s32.totalorder 1, %s12
      %p210 = scmp.lt.s32.totalorder %s12, 5
      %p211 = pnand %p209, %p210
      %p212 = pneg %p211
      // Predicated region
      $region37: #{tpu_custom_call.1} parent=5 // pred_check
        _
      $region38: #{tpu_custom_call.1} parent=5 // pred_check_branch
        %214 = sbr.rel (%p211) target = $region40
      $region39: #{tpu_custom_call.1} parent=5 // pred_region
        %s215 = ssub.s32 %s12, 1
        // Predicated region
        $region41: #{tpu_custom_call.1} parent=39 // pred_check
          %p216 = pneg %p45
        $region42: #{tpu_custom_call.1} parent=39 // pred_check_branch
          %218 = sbr.rel (%p216) target = $region44
        $region43: #{tpu_custom_call.1} parent=39 // pred_region
          %219 = dma.done [#allocation7], 16
        $region44: #{tpu_custom_call.1} parent=39 // pred_fallthru
          _
        %220 = sfence
        %p221 = pneg %p45
        %p222 = pneg %p42
        %p223 = pneg %p66
        %p224 = pneg %p63
        %p225 = pneg %p87
        %p226 = pneg %p84
        %p227 = pneg %p108
        %p228 = pneg %p105
        %p229 = scmp.lt.s32.totalorder %s22, 1
        %s230 = scalar_select %p229, %s22, 1
        %s231 = smul.addr %s230, 3
        %s232 = smul.addr %s231, 4
        %s233 = scalar_lea.vmem %s4, %s232
        %p234 = pneg %p134
        %p235 = pneg %p131
        %p236 = pneg %p162
        %p237 = pneg %p159
        %s238 = smul.u32 %s21, %s22
        %p239 = scmp.lt.s32.totalorder %s238, 1
        %s240 = scalar_select %p239, %s238, 1
        %s241 = smul.addr %s240, 2
        %s242 = smul.addr %s241, 4
        %s243 = scalar_lea.vmem %s5, %s242
        %p244 = scmp.lt.s32.totalorder %s22, 1
        %s245 = scalar_select %p244, %s22, 1
        %s246 = smul.addr %s245, 3
        %s247 = smul.addr %s246, 4
        %s248 = scalar_lea.vmem %s4, %s247
        %s249 = smul.u32 %s21, %s22
        %p250 = scmp.lt.s32.totalorder %s249, 1
        %s251 = scalar_select %p250, %s249, 1
        %s252 = smul.addr %s251, 2
        %s253 = smul.addr %s252, 4
        %s254 = scalar_lea.vmem %s5, %s253
        %s255 = smul.u32 %s21, %s22
        %v256 = vld [vmem:[%s248] ss:$4 sm:$0x3]
        %s257 = sld [smem:[#allocation6]]
        %v258 = vstv %s257
        %v259 = vmul.f32 %v258, %v256
        %s260 = sld [smem:[#allocation6 + $0x1b]]
        %v261 = vstv %s260
        %v262 = vmul.f32 %v261, %v256
        %s263 = sld [smem:[#allocation6 + $0x36]]
        %v264 = vstv %s263
        %v265 = vmul.f32 %v264, %v256
        %s266 = scalar_lea.vmem %s248, 1
        %v267 = vld [vmem:[%s266] ss:$4 sm:$0x3]
        %s268 = sld [smem:[#allocation6 + $0x9]]
        %v269 = vstv %s268
        %v270 = vmul.f32 %v269, %v267
        %v271 = vadd.f32 %v259, %v270
        %s272 = sld [smem:[#allocation6 + $0x24]]
        %v273 = vstv %s272
        %v274 = vmul.f32 %v273, %v267
        %v275 = vadd.f32 %v262, %v274
        %s276 = sld [smem:[#allocation6 + $0x3f]]
        %v277 = vstv %s276
        %v278 = vmul.f32 %v277, %v267
        %v279 = vadd.f32 %v265, %v278
        %s280 = scalar_lea.vmem %s248, 2
        %v281 = vld [vmem:[%s280] ss:$4 sm:$0x3]
        %s282 = sld [smem:[#allocation6 + $0x12]]
        %v283 = vstv %s282
        %v284 = vmul.f32 %v283, %v281
        %v285 = vadd.f32 %v271, %v284
        %s286 = sld [smem:[#allocation6 + $0x2d]]
        %v287 = vstv %s286
        %v288 = vmul.f32 %v287, %v281
        %v289 = vadd.f32 %v275, %v288
        %s290 = sld [smem:[#allocation6 + $0x48]]
        %v291 = vstv %s290
        %v292 = vmul.f32 %v291, %v281
        %v293 = vadd.f32 %v279, %v292
        %v294 = vld [vmem:[%s248] ss:$4 sm:$0x7]
        %s295 = sld [smem:[#allocation6 + $0x1]]
        %v296 = vstv %s295
        %v297 = vmul.f32 %v296, %v294
        %299 = vrot.lane.b32.xlu0 %v297, 127
        %v300 = vpop.permute.xlu0 %299
        %v301 = vrot.slane %v300, 1
        %vm302 = vcmask 1039360
        %v303 = vsel %vm302, %v300, %v301
        %v305 = vadd.f32 %v285, %v303
        %s306 = sld [smem:[#allocation6 + $0x1c]]
        %v307 = vstv %s306
        %v308 = vmul.f32 %v307, %v294
        %310 = vrot.lane.b32.xlu0 %v308, 127
        %v311 = vpop.permute.xlu0 %310
        %v312 = vrot.slane %v311, 1
        %v313 = vsel %vm302, %v311, %v312
        %v315 = vadd.f32 %v289, %v313
        %s316 = sld [smem:[#allocation6 + $0x37]]
        %v317 = vstv %s316
        %v318 = vmul.f32 %v317, %v294
        %320 = vrot.lane.b32.xlu0 %v318, 127
        %v321 = vpop.permute.xlu0 %320
        %v322 = vrot.slane %v321, 1
        %v323 = vsel %vm302, %v321, %v322
        %v325 = vadd.f32 %v293, %v323
        %v326 = vld [vmem:[%s266] ss:$4 sm:$0x7]
        %s327 = sld [smem:[#allocation6 + $0xa]]
        %v328 = vstv %s327
        %v329 = vmul.f32 %v328, %v326
        %331 = vrot.lane.b32.xlu0 %v329, 127
        %v332 = vpop.permute.xlu0 %331
        %v333 = vrot.slane %v332, 1
        %v334 = vsel %vm302, %v332, %v333
        %v336 = vadd.f32 %v305, %v334
        %s337 = sld [smem:[#allocation6 + $0x25]]
        %v338 = vstv %s337
        %v339 = vmul.f32 %v338, %v326
        %341 = vrot.lane.b32.xlu0 %v339, 127
        %v342 = vpop.permute.xlu0 %341
        %v343 = vrot.slane %v342, 1
        %v344 = vsel %vm302, %v342, %v343
        %v346 = vadd.f32 %v315, %v344
        %s347 = sld [smem:[#allocation6 + $0x40]]
        %v348 = vstv %s347
        %v349 = vmul.f32 %v348, %v326
        %351 = vrot.lane.b32.xlu0 %v349, 127
        %v352 = vpop.permute.xlu0 %351
        %v353 = vrot.slane %v352, 1
        %v354 = vsel %vm302, %v352, %v353
        %v356 = vadd.f32 %v325, %v354
        %v357 = vld [vmem:[%s280] ss:$4 sm:$0x7]
        %s358 = sld [smem:[#allocation6 + $0x13]]
        %v359 = vstv %s358
        %v360 = vmul.f32 %v359, %v357
        %362 = vrot.lane.b32.xlu0 %v360, 127
        %v363 = vpop.permute.xlu0 %362
        %v364 = vrot.slane %v363, 1
        %v365 = vsel %vm302, %v363, %v364
        %v367 = vadd.f32 %v336, %v365
        %s368 = sld [smem:[#allocation6 + $0x2e]]
        %v369 = vstv %s368
        %v370 = vmul.f32 %v369, %v357
        %372 = vrot.lane.b32.xlu0 %v370, 127
        %v373 = vpop.permute.xlu0 %372
        %v374 = vrot.slane %v373, 1
        %v375 = vsel %vm302, %v373, %v374
        %v377 = vadd.f32 %v346, %v375
        %s378 = sld [smem:[#allocation6 + $0x49]]
        %v379 = vstv %s378
        %v380 = vmul.f32 %v379, %v357
        %382 = vrot.lane.b32.xlu0 %v380, 127
        %v383 = vpop.permute.xlu0 %382
        %v384 = vrot.slane %v383, 1
        %v385 = vsel %vm302, %v383, %v384
        %v387 = vadd.f32 %v356, %v385
        %s388 = sld [smem:[#allocation6 + $0x2]]
        %v389 = vstv %s388
        %v390 = vmul.f32 %v389, %v294
        %392 = vrot.lane.b32.xlu0 %v390, 126
        %v393 = vpop.permute.xlu0 %392
        %v394 = vrot.slane %v393, 1
        %vm395 = vcmask 1031168
        %v396 = vsel %vm395, %v393, %v394
        %v398 = vadd.f32 %v367, %v396
        %s399 = sld [smem:[#allocation6 + $0x1d]]
        %v400 = vstv %s399
        %v401 = vmul.f32 %v400, %v294
        %403 = vrot.lane.b32.xlu0 %v401, 126
        %v404 = vpop.permute.xlu0 %403
        %v405 = vrot.slane %v404, 1
        %v406 = vsel %vm395, %v404, %v405
        %v408 = vadd.f32 %v377, %v406
        %s409 = sld [smem:[#allocation6 + $0x38]]
        %v410 = vstv %s409
        %v411 = vmul.f32 %v410, %v294
        %413 = vrot.lane.b32.xlu0 %v411, 126
        %v414 = vpop.permute.xlu0 %413
        %v415 = vrot.slane %v414, 1
        %v416 = vsel %vm395, %v414, %v415
        %v418 = vadd.f32 %v387, %v416
        %s419 = sld [smem:[#allocation6 + $0xb]]
        %v420 = vstv %s419
        %v421 = vmul.f32 %v420, %v326
        %423 = vrot.lane.b32.xlu0 %v421, 126
        %v424 = vpop.permute.xlu0 %423
        %v425 = vrot.slane %v424, 1
        %v426 = vsel %vm395, %v424, %v425
        %v428 = vadd.f32 %v398, %v426
        %s429 = sld [smem:[#allocation6 + $0x26]]
        %v430 = vstv %s429
        %v431 = vmul.f32 %v430, %v326
        %433 = vrot.lane.b32.xlu0 %v431, 126
        %v434 = vpop.permute.xlu0 %433
        %v435 = vrot.slane %v434, 1
        %v436 = vsel %vm395, %v434, %v435
        %v438 = vadd.f32 %v408, %v436
        %s439 = sld [smem:[#allocation6 + $0x41]]
        %v440 = vstv %s439
        %v441 = vmul.f32 %v440, %v326
        %443 = vrot.lane.b32.xlu0 %v441, 126
        %v444 = vpop.permute.xlu0 %443
        %v445 = vrot.slane %v444, 1
        %v446 = vsel %vm395, %v444, %v445
        %v448 = vadd.f32 %v418, %v446
        %s449 = sld [smem:[#allocation6 + $0x14]]
        %v450 = vstv %s449
        %v451 = vmul.f32 %v450, %v357
        %453 = vrot.lane.b32.xlu0 %v451, 126
        %v454 = vpop.permute.xlu0 %453
        %v455 = vrot.slane %v454, 1
        %v456 = vsel %vm395, %v454, %v455
        %v458 = vadd.f32 %v428, %v456
        %s459 = sld [smem:[#allocation6 + $0x2f]]
        %v460 = vstv %s459
        %v461 = vmul.f32 %v460, %v357
        %463 = vrot.lane.b32.xlu0 %v461, 126
        %v464 = vpop.permute.xlu0 %463
        %v465 = vrot.slane %v464, 1
        %v466 = vsel %vm395, %v464, %v465
        %v468 = vadd.f32 %v438, %v466
        %s469 = sld [smem:[#allocation6 + $0x4a]]
        %v470 = vstv %s469
        %v471 = vmul.f32 %v470, %v357
        %473 = vrot.lane.b32.xlu0 %v471, 126
        %v474 = vpop.permute.xlu0 %473
        %v475 = vrot.slane %v474, 1
        %v476 = vsel %vm395, %v474, %v475
        %v478 = vadd.f32 %v448, %v476
        %s479 = sld [smem:[#allocation6 + $0x3]]
        %v480 = vstv %s479
        %v481 = vmul.f32 %v480, %v294
        %483 = vrot.lane.b32.xlu0 %v481, 112
        %v484 = vpop.permute.xlu0 %483
        %v485 = vrot.slane %v484, 1
        %vm486 = vcmask 916480
        %v487 = vsel %vm486, %v484, %v485
        %v489 = vadd.f32 %v458, %v487
        %s490 = sld [smem:[#allocation6 + $0x1e]]
        %v491 = vstv %s490
        %v492 = vmul.f32 %v491, %v294
        %494 = vrot.lane.b32.xlu0 %v492, 112
        %v495 = vpop.permute.xlu0 %494
        %v496 = vrot.slane %v495, 1
        %v497 = vsel %vm486, %v495, %v496
        %v499 = vadd.f32 %v468, %v497
        %s500 = sld [smem:[#allocation6 + $0x39]]
        %v501 = vstv %s500
        %v502 = vmul.f32 %v501, %v294
        %504 = vrot.lane.b32.xlu0 %v502, 112
        %v505 = vpop.permute.xlu0 %504
        %v506 = vrot.slane %v505, 1
        %v507 = vsel %vm486, %v505, %v506
        %v509 = vadd.f32 %v478, %v507
        %s510 = sld [smem:[#allocation6 + $0xc]]
        %v511 = vstv %s510
        %v512 = vmul.f32 %v511, %v326
        %514 = vrot.lane.b32.xlu0 %v512, 112
        %v515 = vpop.permute.xlu0 %514
        %v516 = vrot.slane %v515, 1
        %v517 = vsel %vm486, %v515, %v516
        %v519 = vadd.f32 %v489, %v517
        %s520 = sld [smem:[#allocation6 + $0x27]]
        %v521 = vstv %s520
        %v522 = vmul.f32 %v521, %v326
        %524 = vrot.lane.b32.xlu0 %v522, 112
        %v525 = vpop.permute.xlu0 %524
        %v526 = vrot.slane %v525, 1
        %v527 = vsel %vm486, %v525, %v526
        %v529 = vadd.f32 %v499, %v527
        %s530 = sld [smem:[#allocation6 + $0x42]]
        %v531 = vstv %s530
        %v532 = vmul.f32 %v531, %v326
        %534 = vrot.lane.b32.xlu0 %v532, 112
        %v535 = vpop.permute.xlu0 %534
        %v536 = vrot.slane %v535, 1
        %v537 = vsel %vm486, %v535, %v536
        %v539 = vadd.f32 %v509, %v537
        %s540 = sld [smem:[#allocation6 + $0x15]]
        %v541 = vstv %s540
        %v542 = vmul.f32 %v541, %v357
        %544 = vrot.lane.b32.xlu0 %v542, 112
        %v545 = vpop.permute.xlu0 %544
        %v546 = vrot.slane %v545, 1
        %v547 = vsel %vm486, %v545, %v546
        %v549 = vadd.f32 %v519, %v547
        %s550 = sld [smem:[#allocation6 + $0x30]]
        %v551 = vstv %s550
        %v552 = vmul.f32 %v551, %v357
        %554 = vrot.lane.b32.xlu0 %v552, 112
        %v555 = vpop.permute.xlu0 %554
        %v556 = vrot.slane %v555, 1
        %v557 = vsel %vm486, %v555, %v556
        %v559 = vadd.f32 %v529, %v557
        %s560 = sld [smem:[#allocation6 + $0x4b]]
        %v561 = vstv %s560
        %v562 = vmul.f32 %v561, %v357
        %564 = vrot.lane.b32.xlu0 %v562, 112
        %v565 = vpop.permute.xlu0 %564
        %v566 = vrot.slane %v565, 1
        %v567 = vsel %vm486, %v565, %v566
        %v569 = vadd.f32 %v539, %v567
        %s570 = sld [smem:[#allocation6 + $0x4]]
        %v571 = vstv %s570
        %v572 = vmul.f32 %v571, %v294
        %574 = vrot.lane.b32.xlu0 %v572, 111
        %v575 = vpop.permute.xlu0 %574
        %v576 = vrot.slane %v575, 1
        %vm577 = vcmask 908288
        %v578 = vsel %vm577, %v575, %v576
        %v580 = vadd.f32 %v549, %v578
        %s581 = sld [smem:[#allocation6 + $0x1f]]
        %v582 = vstv %s581
        %v583 = vmul.f32 %v582, %v294
        %585 = vrot.lane.b32.xlu0 %v583, 111
        %v586 = vpop.permute.xlu0 %585
        %v587 = vrot.slane %v586, 1
        %v588 = vsel %vm577, %v586, %v587
        %v590 = vadd.f32 %v559, %v588
        %s591 = sld [smem:[#allocation6 + $0x3a]]
        %v592 = vstv %s591
        %v593 = vmul.f32 %v592, %v294
        %595 = vrot.lane.b32.xlu0 %v593, 111
        %v596 = vpop.permute.xlu0 %595
        %v597 = vrot.slane %v596, 1
        %v598 = vsel %vm577, %v596, %v597
        %v600 = vadd.f32 %v569, %v598
        %s601 = sld [smem:[#allocation6 + $0xd]]
        %v602 = vstv %s601
        %v603 = vmul.f32 %v602, %v326
        %605 = vrot.lane.b32.xlu0 %v603, 111
        %v606 = vpop.permute.xlu0 %605
        %v607 = vrot.slane %v606, 1
        %v608 = vsel %vm577, %v606, %v607
        %v610 = vadd.f32 %v580, %v608
        %s611 = sld [smem:[#allocation6 + $0x28]]
        %v612 = vstv %s611
        %v613 = vmul.f32 %v612, %v326
        %615 = vrot.lane.b32.xlu0 %v613, 111
        %v616 = vpop.permute.xlu0 %615
        %v617 = vrot.slane %v616, 1
        %v618 = vsel %vm577, %v616, %v617
        %v620 = vadd.f32 %v590, %v618
        %s621 = sld [smem:[#allocation6 + $0x43]]
        %v622 = vstv %s621
        %v623 = vmul.f32 %v622, %v326
        %625 = vrot.lane.b32.xlu0 %v623, 111
        %v626 = vpop.permute.xlu0 %625
        %v627 = vrot.slane %v626, 1
        %v628 = vsel %vm577, %v626, %v627
        %v630 = vadd.f32 %v600, %v628
        %s631 = sld [smem:[#allocation6 + $0x16]]
        %v632 = vstv %s631
        %v633 = vmul.f32 %v632, %v357
        %635 = vrot.lane.b32.xlu0 %v633, 111
        %v636 = vpop.permute.xlu0 %635
        %v637 = vrot.slane %v636, 1
        %v638 = vsel %vm577, %v636, %v637
        %v640 = vadd.f32 %v610, %v638
        %s641 = sld [smem:[#allocation6 + $0x31]]
        %v642 = vstv %s641
        %v643 = vmul.f32 %v642, %v357
        %645 = vrot.lane.b32.xlu0 %v643, 111
        %v646 = vpop.permute.xlu0 %645
        %v647 = vrot.slane %v646, 1
        %v648 = vsel %vm577, %v646, %v647
        %v650 = vadd.f32 %v620, %v648
        %s651 = sld [smem:[#allocation6 + $0x4c]]
        %v652 = vstv %s651
        %v653 = vmul.f32 %v652, %v357
        %655 = vrot.lane.b32.xlu0 %v653, 111
        %v656 = vpop.permute.xlu0 %655
        %v657 = vrot.slane %v656, 1
        %v658 = vsel %vm577, %v656, %v657
        %v660 = vadd.f32 %v630, %v658
        %s661 = sld [smem:[#allocation6 + $0x5]]
        %v662 = vstv %s661
        %v663 = vmul.f32 %v662, %v294
        %665 = vrot.lane.b32.xlu0 %v663, 110
        %v666 = vpop.permute.xlu0 %665
        %v667 = vrot.slane %v666, 1
        %vm668 = vcmask 900096
        %v669 = vsel %vm668, %v666, %v667
        %v671 = vadd.f32 %v640, %v669
        %s672 = sld [smem:[#allocation6 + $0x20]]
        %v673 = vstv %s672
        %v674 = vmul.f32 %v673, %v294
        %676 = vrot.lane.b32.xlu0 %v674, 110
        %v677 = vpop.permute.xlu0 %676
        %v678 = vrot.slane %v677, 1
        %v679 = vsel %vm668, %v677, %v678
        %v681 = vadd.f32 %v650, %v679
        %s682 = sld [smem:[#allocation6 + $0x3b]]
        %v683 = vstv %s682
        %v684 = vmul.f32 %v683, %v294
        %686 = vrot.lane.b32.xlu0 %v684, 110
        %v687 = vpop.permute.xlu0 %686
        %v688 = vrot.slane %v687, 1
        %v689 = vsel %vm668, %v687, %v688
        %v691 = vadd.f32 %v660, %v689
        %s692 = sld [smem:[#allocation6 + $0xe]]
        %v693 = vstv %s692
        %v694 = vmul.f32 %v693, %v326
        %696 = vrot.lane.b32.xlu0 %v694, 110
        %v697 = vpop.permute.xlu0 %696
        %v698 = vrot.slane %v697, 1
        %v699 = vsel %vm668, %v697, %v698
        %v701 = vadd.f32 %v671, %v699
        %s702 = sld [smem:[#allocation6 + $0x29]]
        %v703 = vstv %s702
        %v704 = vmul.f32 %v703, %v326
        %706 = vrot.lane.b32.xlu0 %v704, 110
        %v707 = vpop.permute.xlu0 %706
        %v708 = vrot.slane %v707, 1
        %v709 = vsel %vm668, %v707, %v708
        %v711 = vadd.f32 %v681, %v709
        %s712 = sld [smem:[#allocation6 + $0x44]]
        %v713 = vstv %s712
        %v714 = vmul.f32 %v713, %v326
        %716 = vrot.lane.b32.xlu0 %v714, 110
        %v717 = vpop.permute.xlu0 %716
        %v718 = vrot.slane %v717, 1
        %v719 = vsel %vm668, %v717, %v718
        %v721 = vadd.f32 %v691, %v719
        %s722 = sld [smem:[#allocation6 + $0x17]]
        %v723 = vstv %s722
        %v724 = vmul.f32 %v723, %v357
        %726 = vrot.lane.b32.xlu0 %v724, 110
        %v727 = vpop.permute.xlu0 %726
        %v728 = vrot.slane %v727, 1
        %v729 = vsel %vm668, %v727, %v728
        %v731 = vadd.f32 %v701, %v729
        %s732 = sld [smem:[#allocation6 + $0x32]]
        %v733 = vstv %s732
        %v734 = vmul.f32 %v733, %v357
        %736 = vrot.lane.b32.xlu0 %v734, 110
        %v737 = vpop.permute.xlu0 %736
        %v738 = vrot.slane %v737, 1
        %v739 = vsel %vm668, %v737, %v738
        %v741 = vadd.f32 %v711, %v739
        %s742 = sld [smem:[#allocation6 + $0x4d]]
        %v743 = vstv %s742
        %v744 = vmul.f32 %v743, %v357
        %746 = vrot.lane.b32.xlu0 %v744, 110
        %v747 = vpop.permute.xlu0 %746
        %v748 = vrot.slane %v747, 1
        %v749 = vsel %vm668, %v747, %v748
        %v751 = vadd.f32 %v721, %v749
        %s752 = sld [smem:[#allocation6 + $0x6]]
        %v753 = vstv %s752
        %v754 = vmul.f32 %v753, %v294
        %756 = vrot.lane.b32.xlu0 %v754, 96
        %v757 = vpop.permute.xlu0 %756
        %v758 = vrot.slane %v757, 1
        %vm759 = vcmask 785408
        %v760 = vsel %vm759, %v757, %v758
        %v762 = vadd.f32 %v731, %v760
        %s763 = sld [smem:[#allocation6 + $0x21]]
        %v764 = vstv %s763
        %v765 = vmul.f32 %v764, %v294
        %767 = vrot.lane.b32.xlu0 %v765, 96
        %v768 = vpop.permute.xlu0 %767
        %v769 = vrot.slane %v768, 1
        %v770 = vsel %vm759, %v768, %v769
        %v772 = vadd.f32 %v741, %v770
        %s773 = sld [smem:[#allocation6 + $0x3c]]
        %v774 = vstv %s773
        %v775 = vmul.f32 %v774, %v294
        %777 = vrot.lane.b32.xlu0 %v775, 96
        %v778 = vpop.permute.xlu0 %777
        %v779 = vrot.slane %v778, 1
        %v780 = vsel %vm759, %v778, %v779
        %v782 = vadd.f32 %v751, %v780
        %s783 = sld [smem:[#allocation6 + $0xf]]
        %v784 = vstv %s783
        %v785 = vmul.f32 %v784, %v326
        %787 = vrot.lane.b32.xlu0 %v785, 96
        %v788 = vpop.permute.xlu0 %787
        %v789 = vrot.slane %v788, 1
        %v790 = vsel %vm759, %v788, %v789
        %v792 = vadd.f32 %v762, %v790
        %s793 = sld [smem:[#allocation6 + $0x2a]]
        %v794 = vstv %s793
        %v795 = vmul.f32 %v794, %v326
        %797 = vrot.lane.b32.xlu0 %v795, 96
        %v798 = vpop.permute.xlu0 %797
        %v799 = vrot.slane %v798, 1
        %v800 = vsel %vm759, %v798, %v799
        %v802 = vadd.f32 %v772, %v800
        %s803 = sld [smem:[#allocation6 + $0x45]]
        %v804 = vstv %s803
        %v805 = vmul.f32 %v804, %v326
        %807 = vrot.lane.b32.xlu0 %v805, 96
        %v808 = vpop.permute.xlu0 %807
        %v809 = vrot.slane %v808, 1
        %v810 = vsel %vm759, %v808, %v809
        %v812 = vadd.f32 %v782, %v810
        %s813 = sld [smem:[#allocation6 + $0x18]]
        %v814 = vstv %s813
        %v815 = vmul.f32 %v814, %v357
        %817 = vrot.lane.b32.xlu0 %v815, 96
        %v818 = vpop.permute.xlu0 %817
        %v819 = vrot.slane %v818, 1
        %v820 = vsel %vm759, %v818, %v819
        %v822 = vadd.f32 %v792, %v820
        %s823 = sld [smem:[#allocation6 + $0x33]]
        %v824 = vstv %s823
        %v825 = vmul.f32 %v824, %v357
        %827 = vrot.lane.b32.xlu0 %v825, 96
        %v828 = vpop.permute.xlu0 %827
        %v829 = vrot.slane %v828, 1
        %v830 = vsel %vm759, %v828, %v829
        %v832 = vadd.f32 %v802, %v830
        %s833 = sld [smem:[#allocation6 + $0x4e]]
        %v834 = vstv %s833
        %v835 = vmul.f32 %v834, %v357
        %837 = vrot.lane.b32.xlu0 %v835, 96
        %v838 = vpop.permute.xlu0 %837
        %v839 = vrot.slane %v838, 1
        %v840 = vsel %vm759, %v838, %v839
        %v842 = vadd.f32 %v812, %v840
        %s843 = sld [smem:[#allocation6 + $0x7]]
        %v844 = vstv %s843
        %v845 = vmul.f32 %v844, %v294
        %847 = vrot.lane.b32.xlu0 %v845, 95
        %v848 = vpop.permute.xlu0 %847
        %v849 = vrot.slane %v848, 1
        %vm850 = vcmask 777216
        %v851 = vsel %vm850, %v848, %v849
        %v853 = vadd.f32 %v822, %v851
        %s854 = sld [smem:[#allocation6 + $0x22]]
        %v855 = vstv %s854
        %v856 = vmul.f32 %v855, %v294
        %858 = vrot.lane.b32.xlu0 %v856, 95
        %v859 = vpop.permute.xlu0 %858
        %v860 = vrot.slane %v859, 1
        %v861 = vsel %vm850, %v859, %v860
        %v863 = vadd.f32 %v832, %v861
        %s864 = sld [smem:[#allocation6 + $0x3d]]
        %v865 = vstv %s864
        %v866 = vmul.f32 %v865, %v294
        %868 = vrot.lane.b32.xlu0 %v866, 95
        %v869 = vpop.permute.xlu0 %868
        %v870 = vrot.slane %v869, 1
        %v871 = vsel %vm850, %v869, %v870
        %v873 = vadd.f32 %v842, %v871
        %s874 = sld [smem:[#allocation6 + $0x10]]
        %v875 = vstv %s874
        %v876 = vmul.f32 %v875, %v326
        %878 = vrot.lane.b32.xlu0 %v876, 95
        %v879 = vpop.permute.xlu0 %878
        %v880 = vrot.slane %v879, 1
        %v881 = vsel %vm850, %v879, %v880
        %v883 = vadd.f32 %v853, %v881
        %s884 = sld [smem:[#allocation6 + $0x2b]]
        %v885 = vstv %s884
        %v886 = vmul.f32 %v885, %v326
        %888 = vrot.lane.b32.xlu0 %v886, 95
        %v889 = vpop.permute.xlu0 %888
        %v890 = vrot.slane %v889, 1
        %v891 = vsel %vm850, %v889, %v890
        %v893 = vadd.f32 %v863, %v891
        %s894 = sld [smem:[#allocation6 + $0x46]]
        %v895 = vstv %s894
        %v896 = vmul.f32 %v895, %v326
        %898 = vrot.lane.b32.xlu0 %v896, 95
        %v899 = vpop.permute.xlu0 %898
        %v900 = vrot.slane %v899, 1
        %v901 = vsel %vm850, %v899, %v900
        %v903 = vadd.f32 %v873, %v901
        %s904 = sld [smem:[#allocation6 + $0x19]]
        %v905 = vstv %s904
        %v906 = vmul.f32 %v905, %v357
        %908 = vrot.lane.b32.xlu0 %v906, 95
        %v909 = vpop.permute.xlu0 %908
        %v910 = vrot.slane %v909, 1
        %v911 = vsel %vm850, %v909, %v910
        %v913 = vadd.f32 %v883, %v911
        %s914 = sld [smem:[#allocation6 + $0x34]]
        %v915 = vstv %s914
        %v916 = vmul.f32 %v915, %v357
        %918 = vrot.lane.b32.xlu0 %v916, 95
        %v919 = vpop.permute.xlu0 %918
        %v920 = vrot.slane %v919, 1
        %v921 = vsel %vm850, %v919, %v920
        %v923 = vadd.f32 %v893, %v921
        %s924 = sld [smem:[#allocation6 + $0x4f]]
        %v925 = vstv %s924
        %v926 = vmul.f32 %v925, %v357
        %928 = vrot.lane.b32.xlu0 %v926, 95
        %v929 = vpop.permute.xlu0 %928
        %v930 = vrot.slane %v929, 1
        %v931 = vsel %vm850, %v929, %v930
        %v933 = vadd.f32 %v903, %v931
        %s934 = sld [smem:[#allocation6 + $0x8]]
        %v935 = vstv %s934
        %v936 = vmul.f32 %v935, %v294
        %938 = vrot.lane.b32.xlu0 %v936, 94
        %v939 = vpop.permute.xlu0 %938
        %v940 = vrot.slane %v939, 1
        %vm941 = vcmask 769024
        %v942 = vsel %vm941, %v939, %v940
        %v944 = vadd.f32 %v913, %v942
        %s945 = sld [smem:[#allocation6 + $0x23]]
        %v946 = vstv %s945
        %v947 = vmul.f32 %v946, %v294
        %949 = vrot.lane.b32.xlu0 %v947, 94
        %v950 = vpop.permute.xlu0 %949
        %v951 = vrot.slane %v950, 1
        %v952 = vsel %vm941, %v950, %v951
        %v954 = vadd.f32 %v923, %v952
        %s955 = sld [smem:[#allocation6 + $0x3e]]
        %v956 = vstv %s955
        %v957 = vmul.f32 %v956, %v294
        %959 = vrot.lane.b32.xlu0 %v957, 94
        %v960 = vpop.permute.xlu0 %959
        %v961 = vrot.slane %v960, 1
        %v962 = vsel %vm941, %v960, %v961
        %v964 = vadd.f32 %v933, %v962
        %s965 = sld [smem:[#allocation6 + $0x11]]
        %v966 = vstv %s965
        %v967 = vmul.f32 %v966, %v326
        %969 = vrot.lane.b32.xlu0 %v967, 94
        %v970 = vpop.permute.xlu0 %969
        %v971 = vrot.slane %v970, 1
        %v972 = vsel %vm941, %v970, %v971
        %v974 = vadd.f32 %v944, %v972
        %s975 = sld [smem:[#allocation6 + $0x2c]]
        %v976 = vstv %s975
        %v977 = vmul.f32 %v976, %v326
        %979 = vrot.lane.b32.xlu0 %v977, 94
        %v980 = vpop.permute.xlu0 %979
        %v981 = vrot.slane %v980, 1
        %v982 = vsel %vm941, %v980, %v981
        %v984 = vadd.f32 %v954, %v982
        %s985 = sld [smem:[#allocation6 + $0x47]]
        %v986 = vstv %s985
        %v987 = vmul.f32 %v986, %v326
        %989 = vrot.lane.b32.xlu0 %v987, 94
        %v990 = vpop.permute.xlu0 %989
        %v991 = vrot.slane %v990, 1
        %v992 = vsel %vm941, %v990, %v991
        %v994 = vadd.f32 %v964, %v992
        %s995 = sld [smem:[#allocation6 + $0x1a]]
        %v996 = vstv %s995
        %v997 = vmul.f32 %v996, %v357
        %999 = vrot.lane.b32.xlu0 %v997, 94
        %v1000 = vpop.permute.xlu0 %999
        %v1001 = vrot.slane %v1000, 1
        %v1002 = vsel %vm941, %v1000, %v1001
        %v1004 = vadd.f32 %v974, %v1002
        %s1005 = sld [smem:[#allocation6 + $0x35]]
        %v1006 = vstv %s1005
        %v1007 = vmul.f32 %v1006, %v357
        %1009 = vrot.lane.b32.xlu0 %v1007, 94
        %v1010 = vpop.permute.xlu0 %1009
        %v1011 = vrot.slane %v1010, 1
        %v1012 = vsel %vm941, %v1010, %v1011
        %v1014 = vadd.f32 %v984, %v1012
        %s1015 = sld [smem:[#allocation6 + $0x50]]
        %v1016 = vstv %s1015
        %v1017 = vmul.f32 %v1016, %v357
        %1019 = vrot.lane.b32.xlu0 %v1017, 94
        %v1020 = vpop.permute.xlu0 %1019
        %v1021 = vrot.slane %v1020, 1
        %v1022 = vsel %vm941, %v1020, %v1021
        %v1024 = vadd.f32 %v994, %v1022
        %v1026 = vlaneseq
        %v1027 = vshrl.u32 %v1026, 7
        %v1028 = vsub.s32 0, %v1027
        %v1029 = vrot.slane %v1004, %v1028
        %v1030 = vlaneseq
        %v1031 = vshrl.u32 %v1030, 7
        %v1032 = vsub.s32 1, %v1031
        %v1033 = vrot.slane %v1004, %v1032
        %v1037 = vlaneseq
        %v1038 = vshrl.u32 %v1037, 7
        %v1039 = vsub.s32 0, %v1038
        %v1040 = vrot.slane %v1014, %v1039
        %v1041 = vlaneseq
        %v1042 = vshrl.u32 %v1041, 7
        %v1043 = vsub.s32 1, %v1042
        %v1044 = vrot.slane %v1014, %v1043
        %v1048 = vlaneseq
        %v1049 = vshrl.u32 %v1048, 7
        %v1050 = vsub.s32 0, %v1049
        %v1051 = vrot.slane %v1024, %v1050
        %v1052 = vlaneseq
        %v1053 = vshrl.u32 %v1052, 7
        %v1054 = vsub.s32 1, %v1053
        %v1055 = vrot.slane %v1024, %v1054
        %vm1058 = vcmask 1040384
        %v1059 = vsel %vm1058, %v1029, %v1040
        %v1060 = vsel %vm1058, %v1033, %v1044
        %vm1061 = vcmask 1041408
        %v1062 = vsel %vm1061, %v1059, %v1051
        %v1063 = vsel %vm1061, %v1060, %v1055
        %p1064 = scmp.eq.s32.totalorder %s21, 0
        // Predicated region
        $region45: #{tpu_custom_call.1} parent=39 // pred_check
          %p1065 = pneg %p1064
        $region46: #{tpu_custom_call.1} parent=39 // pred_check_branch
          %1067 = sbr.rel (%p1065) target = $region48
        $region47: #{tpu_custom_call.1} parent=39 // pred_region
          %p1068 = scmp.eq.s32.totalorder %s22, 0
          // Predicated region
          $region49: #{tpu_custom_call.1} parent=47 // pred_check
            %p1069 = pneg %p1068
          $region50: #{tpu_custom_call.1} parent=47 // pred_check_branch
            %1071 = sbr.rel (%p1069) target = $region52
          $region51: #{tpu_custom_call.1} parent=47 // pred_region
            %vm1072 = vcmask 2048
            %1073 = vst.msk [vmem:[#allocation2] sm:$0x7] %vm1072, 0.0
            %1074 = vst.msk [vmem:[#allocation3] sm:$0x7] %vm1072, 0.0
          $region52: #{tpu_custom_call.1} parent=47 // pred_fallthru
            _
          %v1075 = vld [vmem:[%s3] sm:$0x3]
          %v1077 = vlaneseq
          %v1078 = vshrl.u32 %v1077, 7
          %v1079 = vsub.s32 0, %v1078
          %v1080 = vrot.slane %v1075, %v1079
          %v1081 = vlaneseq
          %v1082 = vshrl.u32 %v1081, 7
          %v1083 = vsub.s32 1, %v1082
          %v1084 = vrot.slane %v1075, %v1083
          %v1087 = vmul.f32 %v1062, %v1080
          %v1088 = vmul.f32 %v1063, %v1084
          %v1089 = vld [vmem:[#allocation2] sm:$0x7]
          %vm1090 = vcmask 1042432
          %v1091 = vsel %vm1090, %v1087, 0.0
          %v1092 = vsel %vm1090, %v1088, 0.0
          %v1093 = vadd.f32 %v1091, %v1092
          %1094 = vadd.xlane.f32.xlu0 %v1093
          %v1095 = vpop.xlane.xlu0 %1094
          %v1096 = vadd.f32 %v1089, %v1095
          %vm1097 = vcmask 2048
          %1098 = vst.msk [vmem:[#allocation2] sm:$0x7] %vm1097, %v1096
          %v1099 = vld [vmem:[#allocation3] sm:$0x7]
          %v1100 = vmul.f32 %v1087, %v1087
          %v1101 = vmul.f32 %v1088, %v1088
          %v1102 = vsel %vm1090, %v1100, 0.0
          %v1103 = vsel %vm1090, %v1101, 0.0
          %v1104 = vadd.f32 %v1102, %v1103
          %1105 = vadd.xlane.f32.xlu0 %v1104
          %v1106 = vpop.xlane.xlu0 %1105
          %v1107 = vadd.f32 %v1099, %v1106
          %1108 = vst.msk [vmem:[#allocation3] sm:$0x7] %vm1097, %v1107
          %p1109 = scmp.eq.s32.totalorder %s22, 1
          // Predicated region
          $region53: #{tpu_custom_call.1} parent=47 // pred_check
            %p1110 = pneg %p1109
          $region54: #{tpu_custom_call.1} parent=47 // pred_check_branch
            %1112 = sbr.rel (%p1110) target = $region56
          $region55: #{tpu_custom_call.1} parent=47 // pred_region
            %v1113 = vld [vmem:[#allocation2] sm:$0x7]
            %v1114 = vmul.f32 %v1113, 0.0025510204
            %v1115 = vld [vmem:[#allocation3] sm:$0x7]
            %v1116 = vmul.f32 %v1115, 0.0025510204
            %v1117 = vmul.f32 %v1114, %v1114
            %v1118 = vsub.f32 %v1116, %v1117
            %v1119 = vmax.f32 %v1118, 0.0
            %v1120 = vld [vmem:[%s1] sm:$0x7]
            %v1121 = vadd.f32 %v1119, 1e-05
            %v1122 = vrsqrt.pop %v1121
            %v1123 = vmul.f32 %v1120, %v1122
            %1124 = vst.msk [vmem:[#allocation4] sm:$0x7] %vm1097, %v1123
            %v1125 = vld [vmem:[%s2] sm:$0x7]
            %v1126 = vmul.f32 %v1114, %v1123
            %v1127 = vsub.f32 %v1125, %v1126
            %1128 = vst.msk [vmem:[#allocation5] sm:$0x7] %vm1097, %v1127
          $region56: #{tpu_custom_call.1} parent=47 // pred_fallthru
            _
        $region48: #{tpu_custom_call.1} parent=39 // pred_fallthru
          _
        %p1129 = scmp.eq.s32.totalorder %s21, 1
        // Predicated region
        $region57: #{tpu_custom_call.1} parent=39 // pred_check
          %p1130 = pneg %p1129
        $region58: #{tpu_custom_call.1} parent=39 // pred_check_branch
          %1132 = sbr.rel (%p1130) target = $region60
        $region59: #{tpu_custom_call.1} parent=39 // pred_region
          %v1133 = vld [vmem:[#allocation4] sm:$0x7]
          %1135 = vset.pattern.permute.xlu0 0
          %1136 = vperm.xlu0 %1135, %v1133
          %v1137 = vpop.permute.xlu0 %1136
          %v1139 = vmul.f32 %v1062, %v1137
          %v1140 = vmul.f32 %v1063, %v1137
          %v1141 = vld [vmem:[#allocation5] sm:$0x7]
          %1143 = vset.pattern.permute.xlu0 0
          %1144 = vperm.xlu0 %1143, %v1141
          %v1145 = vpop.permute.xlu0 %1144
          %v1147 = vadd.f32 %v1139, %v1145
          %v1148 = vadd.f32 %v1140, %v1145
          %v1151 = vcombine.low %v1147, %v1148
          %1153 = vst [vmem:[%s254] sm:$0x77] %v1151
        $region60: #{tpu_custom_call.1} parent=39 // pred_fallthru
          _
        %s1154 = smul.u32 %s21, %s22
        %p1155 = scmp.lt.s32.totalorder %s1154, 1
        %s1156 = scalar_select %p1155, %s1154, 1
        %s1157 = smul.addr %s1156, 2
        %s1158 = smul.addr %s1157, 4
        %s1159 = scalar_lea.vmem %s5, %s1158
        // Predicated region
        $region61: #{tpu_custom_call.1} parent=39 // pred_check
          %p1160 = pneg %p159
        $region62: #{tpu_custom_call.1} parent=39 // pred_check_branch
          %1162 = sbr.rel (%p1160) target = $region64
        $region63: #{tpu_custom_call.1} parent=39 // pred_region
          %s1163 = smul.u32 %s21, %s22
        $region64: #{tpu_custom_call.1} parent=39 // pred_fallthru
          _
      $region40: #{tpu_custom_call.1} parent=5 // pred_fallthru
        _
      %p1164 = scmp.le.s32.totalorder 2, %s12
      // Predicated region
      $region65: #{tpu_custom_call.1} parent=5 // pred_check
        %p1165 = pneg %p1164
      $region66: #{tpu_custom_call.1} parent=5 // pred_check_branch
        %1167 = sbr.rel (%p1165) target = $region68
      $region67: #{tpu_custom_call.1} parent=5 // pred_region
        %s1168 = ssub.s32 %s12, 2
        // Predicated region
        $region69: #{tpu_custom_call.1} parent=67 // pred_check
          %p1169 = pneg %p165
        $region70: #{tpu_custom_call.1} parent=67 // pred_check_branch
          %1171 = sbr.rel (%p1169) target = $region72
        $region71: #{tpu_custom_call.1} parent=67 // pred_region
          %s1172 = smul.u32 %s23, %s24
          %p1173 = scmp.lt.s32.totalorder %s1172, 1
          %s1174 = scalar_select %p1173, %s1172, 1
          %s1175 = smul.addr %s1174, 2
          %s1176 = smul.addr %s1175, 4
          %s1177 = scalar_lea.vmem %s5, %s1176
        $region72: #{tpu_custom_call.1} parent=67 // pred_fallthru
          _
      $region68: #{tpu_custom_call.1} parent=5 // pred_fallthru
        _
    $region6: #{tpu_custom_call.1} parent=1 // loop_footer
      %s16 = sadd.s32 1, %s12
    $region7: #{tpu_custom_call.1} parent=1 // loop_footer_branch
      %11 = sbr.rel target = $region3
    $region8: #{tpu_custom_call.1} parent=1 // loop_exit
      _
    %1178 = vsyncpa [#allocation7], 1
    %s1179 = scalar_lea.sflag [#allocation7], 1
    %1180 = vsyncpa %s1179, 1

</llo_original>
